<compile_context>
chip_gen: v7x
topology: tpu7x:2x2x1
jax: 0.10.0
libtpu: 0.0.40
codegen_flags: <defaults>
</compile_context>

<pallas_src>
import functools
import math

import jax
import jax.numpy as jnp
from jax.experimental import pallas as pl
from jax.experimental.pallas import tpu as pltpu


# ----------------------------------------------------------------------------
# Kernel: one grid step == one batch element.
# ----------------------------------------------------------------------------
def _mha_kernel(heads,
                q_ref, k_ref, v_ref,                    # (1, Sq, D), (1, Sk, D) x2
                wq_ref, bq_ref, wk_ref, bk_ref,         # (D, D) bf16 / (1, D) f32
                wv_ref, bv_ref, wo_ref, bo_ref,
                o_ref):                                 # (1, Sq, D) f32
    _, Sq, D = q_ref.shape
    _, Sk, _ = k_ref.shape
    d_k = D // heads
    f32, bf16 = jnp.float32, jnp.bfloat16

    xq = q_ref[0].astype(bf16)                          # (Sq, D)
    xk = k_ref[0].astype(bf16)                          # (Sk, D)
    xv = v_ref[0].astype(bf16)                          # (Sk, D)

    # Full-width projections: one (S, D) @ (D, D) MXU contraction each.
    # The 1/sqrt(d_k) attention scale is pre-folded into wq/bq.
    q = jnp.dot(xq, wq_ref[...], preferred_element_type=f32) + bq_ref[...]
    k = jnp.dot(xk, wk_ref[...], preferred_element_type=f32) + bk_ref[...]
    v = jnp.dot(xv, wv_ref[...], preferred_element_type=f32) + bv_ref[...]

    # Split heads only for the attention contractions: static lane slices,
    # stacked along a new leading (batch) axis -> batched einsums over heads.
    def split_heads(x):                                 # (S, D) -> (H, S, d_k)
        return jnp.stack([x[:, h * d_k:(h + 1) * d_k] for h in range(heads)],
                         axis=0).astype(bf16)

    qh, kh, vh = split_heads(q), split_heads(k), split_heads(v)

    # Scaled dot-product attention, all heads at once (scale already in q).
    # TODO(synk): mask=None path only (masked_fill branch not implemented).
    s = jnp.einsum('hqd,hkd->hqk', qh, kh, preferred_element_type=f32)
    s = s - jnp.max(s, axis=-1, keepdims=True)          # stable softmax
    p = jnp.exp(s)
    p = p * pl.reciprocal(jnp.sum(p, axis=-1, keepdims=True), approx=True)

    attn = jnp.einsum('hqk,hkd->hqd', p.astype(bf16), vh,
                      preferred_element_type=f32)       # (H, Sq, d_k)

    # Concat heads back along the lane axis (d_k chunks within one 128-lane
    # vreg) and run ONE (Sq, D) @ (D, D) output projection.
    concat = jnp.concatenate([attn[h] for h in range(heads)], axis=-1)  # (Sq, D)
    # TODO(synk): nn.Dropout is eval-mode identity here.
    out = jnp.dot(concat.astype(bf16), wo_ref[...],
                  preferred_element_type=f32) + bo_ref[...]
    o_ref[0] = out


# ----------------------------------------------------------------------------
# One-time weight layout prep (hoisted out of the forward path).
# ----------------------------------------------------------------------------
def prepare_mha_params(params, heads):
    wq, bq, wk, bk, wv, bv, wo, bo = params
    D = wq.shape[0]
    d_k = D // heads
    scale = 1.0 / math.sqrt(d_k)
    bf16, f32 = jnp.bfloat16, jnp.float32
    return (
        (wq * scale).astype(bf16), (bq * scale).reshape(1, D).astype(f32),
        wk.astype(bf16),           bk.reshape(1, D).astype(f32),
        wv.astype(bf16),           bv.reshape(1, D).astype(f32),
        wo.astype(bf16),           bo.reshape(1, D).astype(f32),
    )


# ----------------------------------------------------------------------------
# Forward wrapper: one pallas_call, grid over the batch dimension.
# ----------------------------------------------------------------------------
def multi_head_attention(query, key, value, prep_params, heads):
    N, Sq, D = query.shape
    _, Sk, _ = key.shape
    wq, bq, wk, bk, wv, bv, wo, bo = prep_params

    kernel = functools.partial(_mha_kernel, heads)

    q_spec = pl.BlockSpec((1, Sq, D), lambda n: (n, 0, 0))
    kv_spec = pl.BlockSpec((1, Sk, D), lambda n: (n, 0, 0))
    w_spec = pl.BlockSpec((D, D), lambda n: (0, 0))      # resident across grid
    b_spec = pl.BlockSpec((1, D), lambda n: (0, 0))

    return pl.pallas_call(
        kernel,
        out_shape=jax.ShapeDtypeStruct((N, Sq, D), jnp.float32),
        grid=(N,),
        in_specs=[q_spec, kv_spec, kv_spec,
                  w_spec, b_spec, w_spec, b_spec, w_spec, b_spec,
                  w_spec, b_spec],
        out_specs=pl.BlockSpec((1, Sq, D), lambda n: (n, 0, 0)),
        compiler_params=pltpu.CompilerParams(
            dimension_semantics=("parallel",)),
    )(query, key, value, wq, bq, wk, bk, wv, bv, wo, bo)


# ----------------------------------------------------------------------------
# Pure-JAX reference (float32), mirroring the PyTorch module exactly.
# ----------------------------------------------------------------------------
def mha_reference(query, key, value, params, heads):
    wq, bq, wk, bk, wv, bv, wo, bo = params
    N, Sq, D = query.shape
    Sk = key.shape[1]
    d_k = D // heads

    def lin(x, w, b):
        return x @ w + b

    q = lin(query, wq, bq).reshape(N, Sq, heads, d_k).transpose(0, 2, 1, 3)
    k = lin(key, wk, bk).reshape(N, Sk, heads, d_k).transpose(0, 2, 1, 3)
    v = lin(value, wv, bv).reshape(N, Sk, heads, d_k).transpose(0, 2, 1, 3)
    s = jnp.einsum('nhqd,nhkd->nhqk', q, k) / math.sqrt(d_k)
    p = jax.nn.softmax(s, axis=-1)
    a = jnp.einsum('nhqk,nhkd->nhqd', p, v)
    concat = a.transpose(0, 2, 1, 3).reshape(N, Sq, D)
    return concat @ wo + bo


# ----------------------------------------------------------------------------
# Deterministic synthetic parameters (weights stored as (in, out)).
# ----------------------------------------------------------------------------
def make_params(key, d_model):
    ks = jax.random.split(key, 4)
    std = 1.0 / math.sqrt(d_model)

    def dense(k):
        kw, kb = jax.random.split(k)
        w = jax.random.normal(kw, (d_model, d_model), jnp.float32) * std
        b = jax.random.normal(kb, (d_model,), jnp.float32) * std
        return w, b

    wq, bq = dense(ks[0])
    wk, bk = dense(ks[1])
    wv, bv = dense(ks[2])
    wo, bo = dense(ks[3])
    return wq, bq, wk, bk, wv, bv, wo, bo


if __name__ == "__main__":
    heads, d_model = 4, 32
    batch, seq = 2, 8

    key = jax.random.PRNGKey(0)
    kp, kq, kkv = jax.random.split(key, 3)
    params = make_params(kp, d_model)
    query = jax.random.normal(kq, (batch, seq, d_model), jnp.float32)
    kv = jax.random.normal(kkv, (batch, seq, d_model), jnp.float32)

    # Weight layout prep (scale folding + bf16 cast) runs ONCE, off the
    # per-call forward path.
    prep = jax.tree_util.tree_map(jax.block_until_ready,
                                  prepare_mha_params(params, heads))

    out = multi_head_attention(query, kv, kv, prep, heads)
    out = jax.block_until_ready(out)

    ref = mha_reference(query, kv, kv, params, heads)
    assert out.shape == (batch, seq, d_model)
    assert bool(jnp.all(jnp.isfinite(out)))
    max_err = float(jnp.max(jnp.abs(out - ref)))
    # bf16 MXU operands + approx reciprocal => small numeric delta vs f32 ref.
    assert bool(jnp.allclose(out, ref, atol=5e-2, rtol=5e-2)), max_err
    print("KERNEL_OK")
</pallas_src>

<mosaic_0001>
module attributes {stable_mosaic.version = 11 : i64} {
  func.func @_mha_kernel(%arg0: i32, %arg1: memref<1x8x32xf32, #tpu.memory_space<vmem>>, %arg2: memref<1x8x32xf32, #tpu.memory_space<vmem>>, %arg3: memref<1x8x32xf32, #tpu.memory_space<vmem>>, %arg4: memref<32x32xbf16, #tpu.memory_space<vmem>>, %arg5: memref<1x32xf32, #tpu.memory_space<vmem>>, %arg6: memref<32x32xbf16, #tpu.memory_space<vmem>>, %arg7: memref<1x32xf32, #tpu.memory_space<vmem>>, %arg8: memref<32x32xbf16, #tpu.memory_space<vmem>>, %arg9: memref<1x32xf32, #tpu.memory_space<vmem>>, %arg10: memref<32x32xbf16, #tpu.memory_space<vmem>>, %arg11: memref<1x32xf32, #tpu.memory_space<vmem>>, %arg12: memref<1x8x32xf32, #tpu.memory_space<vmem>>) attributes {dimension_semantics = [#tpu.dimension_semantics<parallel>], iteration_bounds = array<i64: 2>, scalar_prefetch = 0 : i64, scratch_operands = 0 : i64, tpu.core_type = #tpu.core_type<tc>, window_params = [{transform_indices = @transform_0, window_bounds = array<i64: 1, 8, 32>}, {transform_indices = @transform_1, window_bounds = array<i64: 1, 8, 32>}, {transform_indices = @transform_2, window_bounds = array<i64: 1, 8, 32>}, {pipeline_mode = #tpu.pipeline_mode<synchronous>, transform_indices = @transform_3, window_bounds = array<i64: 32, 32>}, {pipeline_mode = #tpu.pipeline_mode<synchronous>, transform_indices = @transform_4, window_bounds = array<i64: 1, 32>}, {pipeline_mode = #tpu.pipeline_mode<synchronous>, transform_indices = @transform_5, window_bounds = array<i64: 32, 32>}, {pipeline_mode = #tpu.pipeline_mode<synchronous>, transform_indices = @transform_6, window_bounds = array<i64: 1, 32>}, {pipeline_mode = #tpu.pipeline_mode<synchronous>, transform_indices = @transform_7, window_bounds = array<i64: 32, 32>}, {pipeline_mode = #tpu.pipeline_mode<synchronous>, transform_indices = @transform_8, window_bounds = array<i64: 1, 32>}, {pipeline_mode = #tpu.pipeline_mode<synchronous>, transform_indices = @transform_9, window_bounds = array<i64: 32, 32>}, {pipeline_mode = #tpu.pipeline_mode<synchronous>, transform_indices = @transform_10, window_bounds = array<i64: 1, 32>}, {transform_indices = @transform_11, window_bounds = array<i64: 1, 8, 32>}]} {
    %c0 = arith.constant 0 : index
    %c0_0 = arith.constant 0 : index
    %c0_1 = arith.constant 0 : index
    %0 = vector.load %arg1[%c0, %c0_0, %c0_1] : memref<1x8x32xf32, #tpu.memory_space<vmem>>, vector<1x8x32xf32>
    %1 = vector.shape_cast %0 : vector<1x8x32xf32> to vector<8x32xf32>
    %2 = arith.truncf %1 : vector<8x32xf32> to vector<8x32xbf16>
    %c0_2 = arith.constant 0 : index
    %c0_3 = arith.constant 0 : index
    %c0_4 = arith.constant 0 : index
    %3 = vector.load %arg2[%c0_2, %c0_3, %c0_4] : memref<1x8x32xf32, #tpu.memory_space<vmem>>, vector<1x8x32xf32>
    %4 = vector.shape_cast %3 : vector<1x8x32xf32> to vector<8x32xf32>
    %5 = arith.truncf %4 : vector<8x32xf32> to vector<8x32xbf16>
    %c0_5 = arith.constant 0 : index
    %c0_6 = arith.constant 0 : index
    %c0_7 = arith.constant 0 : index
    %6 = vector.load %arg3[%c0_5, %c0_6, %c0_7] : memref<1x8x32xf32, #tpu.memory_space<vmem>>, vector<1x8x32xf32>
    %7 = vector.shape_cast %6 : vector<1x8x32xf32> to vector<8x32xf32>
    %8 = arith.truncf %7 : vector<8x32xf32> to vector<8x32xbf16>
    %c0_8 = arith.constant 0 : index
    %c0_9 = arith.constant 0 : index
    %9 = vector.load %arg4[%c0_8, %c0_9] : memref<32x32xbf16, #tpu.memory_space<vmem>>, vector<32x32xbf16>
    %cst = arith.constant dense<0.000000e+00> : vector<8x32xf32>
    %10 = tpu.matmul %2, %9, %cst {dimension_numbers = #tpu.dot_dimension_numbers<[1], [0], [0], [1], [0, 0, 1, 1], [], []>} : vector<8x32xbf16>, vector<32x32xbf16>, vector<8x32xf32> -> vector<8x32xf32>
    %c0_10 = arith.constant 0 : index
    %c0_11 = arith.constant 0 : index
    %11 = vector.load %arg5[%c0_10, %c0_11] : memref<1x32xf32, #tpu.memory_space<vmem>>, vector<1x32xf32>
    %12 = vector.broadcast %11 : vector<1x32xf32> to vector<8x32xf32>
    %13 = arith.addf %10, %12 : vector<8x32xf32>
    %c0_12 = arith.constant 0 : index
    %c0_13 = arith.constant 0 : index
    %14 = vector.load %arg6[%c0_12, %c0_13] : memref<32x32xbf16, #tpu.memory_space<vmem>>, vector<32x32xbf16>
    %cst_14 = arith.constant dense<0.000000e+00> : vector<8x32xf32>
    %15 = tpu.matmul %5, %14, %cst_14 {dimension_numbers = #tpu.dot_dimension_numbers<[1], [0], [0], [1], [0, 0, 1, 1], [], []>} : vector<8x32xbf16>, vector<32x32xbf16>, vector<8x32xf32> -> vector<8x32xf32>
    %c0_15 = arith.constant 0 : index
    %c0_16 = arith.constant 0 : index
    %16 = vector.load %arg7[%c0_15, %c0_16] : memref<1x32xf32, #tpu.memory_space<vmem>>, vector<1x32xf32>
    %17 = vector.broadcast %16 : vector<1x32xf32> to vector<8x32xf32>
    %18 = arith.addf %15, %17 : vector<8x32xf32>
    %c0_17 = arith.constant 0 : index
    %c0_18 = arith.constant 0 : index
    %19 = vector.load %arg8[%c0_17, %c0_18] : memref<32x32xbf16, #tpu.memory_space<vmem>>, vector<32x32xbf16>
    %cst_19 = arith.constant dense<0.000000e+00> : vector<8x32xf32>
    %20 = tpu.matmul %8, %19, %cst_19 {dimension_numbers = #tpu.dot_dimension_numbers<[1], [0], [0], [1], [0, 0, 1, 1], [], []>} : vector<8x32xbf16>, vector<32x32xbf16>, vector<8x32xf32> -> vector<8x32xf32>
    %c0_20 = arith.constant 0 : index
    %c0_21 = arith.constant 0 : index
    %21 = vector.load %arg9[%c0_20, %c0_21] : memref<1x32xf32, #tpu.memory_space<vmem>>, vector<1x32xf32>
    %22 = vector.broadcast %21 : vector<1x32xf32> to vector<8x32xf32>
    %23 = arith.addf %20, %22 : vector<8x32xf32>
    %24 = vector.extract_strided_slice %13 {offsets = [0, 0], sizes = [8, 8], strides = [1, 1]} : vector<8x32xf32> to vector<8x8xf32>
    %25 = vector.extract_strided_slice %13 {offsets = [0, 8], sizes = [8, 8], strides = [1, 1]} : vector<8x32xf32> to vector<8x8xf32>
    %26 = vector.extract_strided_slice %13 {offsets = [0, 16], sizes = [8, 8], strides = [1, 1]} : vector<8x32xf32> to vector<8x8xf32>
    %27 = vector.extract_strided_slice %13 {offsets = [0, 24], sizes = [8, 8], strides = [1, 1]} : vector<8x32xf32> to vector<8x8xf32>
    %28 = vector.shape_cast %24 : vector<8x8xf32> to vector<1x8x8xf32>
    %29 = vector.shape_cast %25 : vector<8x8xf32> to vector<1x8x8xf32>
    %30 = vector.shape_cast %26 : vector<8x8xf32> to vector<1x8x8xf32>
    %31 = vector.shape_cast %27 : vector<8x8xf32> to vector<1x8x8xf32>
    %32 = tpu.concatenate %28, %29, %30, %31 in 0 : vector<1x8x8xf32>, vector<1x8x8xf32>, vector<1x8x8xf32>, vector<1x8x8xf32> -> vector<4x8x8xf32>
    %33 = arith.truncf %32 : vector<4x8x8xf32> to vector<4x8x8xbf16>
    %34 = vector.extract_strided_slice %18 {offsets = [0, 0], sizes = [8, 8], strides = [1, 1]} : vector<8x32xf32> to vector<8x8xf32>
    %35 = vector.extract_strided_slice %18 {offsets = [0, 8], sizes = [8, 8], strides = [1, 1]} : vector<8x32xf32> to vector<8x8xf32>
    %36 = vector.extract_strided_slice %18 {offsets = [0, 16], sizes = [8, 8], strides = [1, 1]} : vector<8x32xf32> to vector<8x8xf32>
    %37 = vector.extract_strided_slice %18 {offsets = [0, 24], sizes = [8, 8], strides = [1, 1]} : vector<8x32xf32> to vector<8x8xf32>
    %38 = vector.shape_cast %34 : vector<8x8xf32> to vector<1x8x8xf32>
    %39 = vector.shape_cast %35 : vector<8x8xf32> to vector<1x8x8xf32>
    %40 = vector.shape_cast %36 : vector<8x8xf32> to vector<1x8x8xf32>
    %41 = vector.shape_cast %37 : vector<8x8xf32> to vector<1x8x8xf32>
    %42 = tpu.concatenate %38, %39, %40, %41 in 0 : vector<1x8x8xf32>, vector<1x8x8xf32>, vector<1x8x8xf32>, vector<1x8x8xf32> -> vector<4x8x8xf32>
    %43 = arith.truncf %42 : vector<4x8x8xf32> to vector<4x8x8xbf16>
    %44 = vector.extract_strided_slice %23 {offsets = [0, 0], sizes = [8, 8], strides = [1, 1]} : vector<8x32xf32> to vector<8x8xf32>
    %45 = vector.extract_strided_slice %23 {offsets = [0, 8], sizes = [8, 8], strides = [1, 1]} : vector<8x32xf32> to vector<8x8xf32>
    %46 = vector.extract_strided_slice %23 {offsets = [0, 16], sizes = [8, 8], strides = [1, 1]} : vector<8x32xf32> to vector<8x8xf32>
    %47 = vector.extract_strided_slice %23 {offsets = [0, 24], sizes = [8, 8], strides = [1, 1]} : vector<8x32xf32> to vector<8x8xf32>
    %48 = vector.shape_cast %44 : vector<8x8xf32> to vector<1x8x8xf32>
    %49 = vector.shape_cast %45 : vector<8x8xf32> to vector<1x8x8xf32>
    %50 = vector.shape_cast %46 : vector<8x8xf32> to vector<1x8x8xf32>
    %51 = vector.shape_cast %47 : vector<8x8xf32> to vector<1x8x8xf32>
    %52 = tpu.concatenate %48, %49, %50, %51 in 0 : vector<1x8x8xf32>, vector<1x8x8xf32>, vector<1x8x8xf32>, vector<1x8x8xf32> -> vector<4x8x8xf32>
    %53 = arith.truncf %52 : vector<4x8x8xf32> to vector<4x8x8xbf16>
    "tpu.trace_start"() <{level = 10 : i32, message = "hqd,hkd->hqk"}> : () -> ()
    %cst_22 = arith.constant dense<0.000000e+00> : vector<4x8x8xf32>
    %54 = tpu.matmul %33, %43, %cst_22 {dimension_numbers = #tpu.dot_dimension_numbers<[2], [2], [1], [1], [0, 0, 0, 1, 1, 1], [0], [0]>} : vector<4x8x8xbf16>, vector<4x8x8xbf16>, vector<4x8x8xf32> -> vector<4x8x8xf32>
    "tpu.trace_stop"() : () -> ()
    %cst_23 = arith.constant dense<0xFF800000> : vector<4x8xf32>
    %55 = vector.multi_reduction <maximumf>, %54, %cst_23 [2] : vector<4x8x8xf32> to vector<4x8xf32>
    %56 = vector.shape_cast %55 : vector<4x8xf32> to vector<4x8x1xf32>
    %57 = vector.broadcast %56 : vector<4x8x1xf32> to vector<4x8x8xf32>
    %58 = arith.subf %54, %57 : vector<4x8x8xf32>
    %59 = math.exp %58 : vector<4x8x8xf32>
    %cst_24 = arith.constant dense<0.000000e+00> : vector<4x8xf32>
    %60 = vector.multi_reduction <add>, %59, %cst_24 [2] : vector<4x8x8xf32> to vector<4x8xf32>
    %61 = vector.shape_cast %60 : vector<4x8xf32> to vector<4x8x1xf32>
    %62 = tpu.reciprocal %61 {approx = true} : vector<4x8x1xf32> -> vector<4x8x1xf32>
    %63 = vector.broadcast %62 : vector<4x8x1xf32> to vector<4x8x8xf32>
    %64 = arith.mulf %59, %63 : vector<4x8x8xf32>
    %65 = arith.truncf %64 : vector<4x8x8xf32> to vector<4x8x8xbf16>
    "tpu.trace_start"() <{level = 10 : i32, message = "hqk,hkd->hqd"}> : () -> ()
    %cst_25 = arith.constant dense<0.000000e+00> : vector<4x8x8xf32>
    %66 = tpu.matmul %65, %53, %cst_25 {dimension_numbers = #tpu.dot_dimension_numbers<[2], [1], [1], [2], [0, 0, 0, 1, 1, 2], [0], [0]>} : vector<4x8x8xbf16>, vector<4x8x8xbf16>, vector<4x8x8xf32> -> vector<4x8x8xf32>
    "tpu.trace_stop"() : () -> ()
    %67 = vector.extract_strided_slice %66 {offsets = [0, 0, 0], sizes = [1, 8, 8], strides = [1, 1, 1]} : vector<4x8x8xf32> to vector<1x8x8xf32>
    %68 = vector.shape_cast %67 : vector<1x8x8xf32> to vector<8x8xf32>
    %69 = vector.extract_strided_slice %66 {offsets = [1, 0, 0], sizes = [1, 8, 8], strides = [1, 1, 1]} : vector<4x8x8xf32> to vector<1x8x8xf32>
    %70 = vector.shape_cast %69 : vector<1x8x8xf32> to vector<8x8xf32>
    %71 = vector.extract_strided_slice %66 {offsets = [2, 0, 0], sizes = [1, 8, 8], strides = [1, 1, 1]} : vector<4x8x8xf32> to vector<1x8x8xf32>
    %72 = vector.shape_cast %71 : vector<1x8x8xf32> to vector<8x8xf32>
    %73 = vector.extract_strided_slice %66 {offsets = [3, 0, 0], sizes = [1, 8, 8], strides = [1, 1, 1]} : vector<4x8x8xf32> to vector<1x8x8xf32>
    %74 = vector.shape_cast %73 : vector<1x8x8xf32> to vector<8x8xf32>
    %75 = tpu.concatenate %68, %70, %72, %74 in 1 : vector<8x8xf32>, vector<8x8xf32>, vector<8x8xf32>, vector<8x8xf32> -> vector<8x32xf32>
    %76 = arith.truncf %75 : vector<8x32xf32> to vector<8x32xbf16>
    %c0_26 = arith.constant 0 : index
    %c0_27 = arith.constant 0 : index
    %77 = vector.load %arg10[%c0_26, %c0_27] : memref<32x32xbf16, #tpu.memory_space<vmem>>, vector<32x32xbf16>
    %cst_28 = arith.constant dense<0.000000e+00> : vector<8x32xf32>
    %78 = tpu.matmul %76, %77, %cst_28 {dimension_numbers = #tpu.dot_dimension_numbers<[1], [0], [0], [1], [0, 0, 1, 1], [], []>} : vector<8x32xbf16>, vector<32x32xbf16>, vector<8x32xf32> -> vector<8x32xf32>
    %c0_29 = arith.constant 0 : index
    %c0_30 = arith.constant 0 : index
    %79 = vector.load %arg11[%c0_29, %c0_30] : memref<1x32xf32, #tpu.memory_space<vmem>>, vector<1x32xf32>
    %80 = vector.broadcast %79 : vector<1x32xf32> to vector<8x32xf32>
    %81 = arith.addf %78, %80 : vector<8x32xf32>
    %c0_31 = arith.constant 0 : index
    %c0_32 = arith.constant 0 : index
    %c0_33 = arith.constant 0 : index
    %82 = vector.load %arg12[%c0_31, %c0_32, %c0_33] : memref<1x8x32xf32, #tpu.memory_space<vmem>>, vector<1x8x32xf32>
    %83 = vector.shape_cast %82 : vector<1x8x32xf32> to vector<8x32xf32>
    %84 = vector.shape_cast %81 : vector<8x32xf32> to vector<1x8x32xf32>
    tpu.vector_store %arg12[%c0_31, %c0_32, %c0_33], %84 {strides = array<i32>} : memref<1x8x32xf32, #tpu.memory_space<vmem>>, vector<1x8x32xf32>,
    return
  }
  func.func @transform_0(%arg0: i32) -> (i32, i32, i32) {
    %c0_i32 = arith.constant 0 : i32
    %c0_i32_0 = arith.constant 0 : i32
    %c0_i32_1 = arith.constant 0 : i32
    return %arg0, %c0_i32, %c0_i32_0 : i32, i32, i32
  }
  func.func @transform_1(%arg0: i32) -> (i32, i32, i32) {
    %c0_i32 = arith.constant 0 : i32
    %c0_i32_0 = arith.constant 0 : i32
    %c0_i32_1 = arith.constant 0 : i32
    return %arg0, %c0_i32, %c0_i32_0 : i32, i32, i32
  }
  func.func @transform_2(%arg0: i32) -> (i32, i32, i32) {
    %c0_i32 = arith.constant 0 : i32
    %c0_i32_0 = arith.constant 0 : i32
    %c0_i32_1 = arith.constant 0 : i32
    return %arg0, %c0_i32, %c0_i32_0 : i32, i32, i32
  }
  func.func @transform_3(%arg0: i32) -> (i32, i32) {
    %c0_i32 = arith.constant 0 : i32
    %c0_i32_0 = arith.constant 0 : i32
    %c0_i32_1 = arith.constant 0 : i32
    return %c0_i32, %c0_i32_0 : i32, i32
  }
  func.func @transform_4(%arg0: i32) -> (i32, i32) {
    %c0_i32 = arith.constant 0 : i32
    %c0_i32_0 = arith.constant 0 : i32
    %c0_i32_1 = arith.constant 0 : i32
    return %c0_i32, %c0_i32_0 : i32, i32
  }
  func.func @transform_5(%arg0: i32) -> (i32, i32) {
    %c0_i32 = arith.constant 0 : i32
    %c0_i32_0 = arith.constant 0 : i32
    %c0_i32_1 = arith.constant 0 : i32
    return %c0_i32, %c0_i32_0 : i32, i32
  }
  func.func @transform_6(%arg0: i32) -> (i32, i32) {
    %c0_i32 = arith.constant 0 : i32
    %c0_i32_0 = arith.constant 0 : i32
    %c0_i32_1 = arith.constant 0 : i32
    return %c0_i32, %c0_i32_0 : i32, i32
  }
  func.func @transform_7(%arg0: i32) -> (i32, i32) {
    %c0_i32 = arith.constant 0 : i32
    %c0_i32_0 = arith.constant 0 : i32
    %c0_i32_1 = arith.constant 0 : i32
    return %c0_i32, %c0_i32_0 : i32, i32
  }
  func.func @transform_8(%arg0: i32) -> (i32, i32) {
    %c0_i32 = arith.constant 0 : i32
    %c0_i32_0 = arith.constant 0 : i32
    %c0_i32_1 = arith.constant 0 : i32
    return %c0_i32, %c0_i32_0 : i32, i32
  }
  func.func @transform_9(%arg0: i32) -> (i32, i32) {
    %c0_i32 = arith.constant 0 : i32
    %c0_i32_0 = arith.constant 0 : i32
    %c0_i32_1 = arith.constant 0 : i32
    return %c0_i32, %c0_i32_0 : i32, i32
  }
  func.func @transform_10(%arg0: i32) -> (i32, i32) {
    %c0_i32 = arith.constant 0 : i32
    %c0_i32_0 = arith.constant 0 : i32
    %c0_i32_1 = arith.constant 0 : i32
    return %c0_i32, %c0_i32_0 : i32, i32
  }
  func.func @transform_11(%arg0: i32) -> (i32, i32, i32) {
    %c0_i32 = arith.constant 0 : i32
    %c0_i32_0 = arith.constant 0 : i32
    %c0_i32_1 = arith.constant 0 : i32
    return %arg0, %c0_i32, %c0_i32_0 : i32, i32, i32
  }
}

</mosaic_0001>

<llo_original>
// kernel: tpu_custom_call.1
$region0: #{tpu_custom_call.1}
  #allocation0 [shape = 'u32[]', space=smem, size = 0x4, offset = 0x4, fixed_abs, tag = 'smem constant byte address 0x4 - core index']
  #allocation1 [shape = 'u32[144,128]{1,0:T(1,128)}', space=vmem, size = 0x12000, scoped, tag = 'internal scratch']
  %s0 = inlined_call_operand.hbm [shape: f32[2,8,32], index: 0, kind: input, shape index: {}]
  %s1 = inlined_call_operand.hbm [shape: f32[2,8,32], index: 1, kind: input, shape index: {}]
  %s2 = inlined_call_operand.hbm [shape: f32[2,8,32], index: 2, kind: input, shape index: {}]
  %s3 = inlined_call_operand.hbm [shape: bf16[32,32], index: 3, kind: input, shape index: {}]
  %s4 = inlined_call_operand.vmem [shape: f32[1,32], index: 4, kind: input, shape index: {}]
  %s5 = inlined_call_operand.vmem [shape: bf16[32,32], index: 5, kind: input, shape index: {}]
  %s6 = inlined_call_operand.vmem [shape: f32[1,32], index: 6, kind: input, shape index: {}]
  %s7 = inlined_call_operand.hbm [shape: bf16[32,32], index: 7, kind: input, shape index: {}]
  %s8 = inlined_call_operand.hbm [shape: f32[1,32], index: 8, kind: input, shape index: {}]
  %s9 = inlined_call_operand.vmem [shape: bf16[32,32], index: 9, kind: input, shape index: {}]
  %s10 = inlined_call_operand.vmem [shape: f32[1,32], index: 10, kind: input, shape index: {}]
  %s11 = inlined_call_operand.hbm [shape: f32[2,8,32], index: 11, kind: output, shape index: {}]
  %s12 = sld [smem:[#allocation0]]
  $region101: #{tpu_custom_call.1} parent=0
    _
  %s14 = ssub.s32 1, %s12
  %s15 = scalar_select 0, %s14, %s12
  $region1: #{tpu_custom_call.1} parent=0
    #allocation2 [shape = 'u8[8192]{0}', space=vmem, size = 0x2000, scoped, tag = 'input window, operand 0']
    #allocation3 [shape = 's32[2]{0}', space=sflag, size = 0x8, scoped, tag = 'scoped memory for tpu_custom_call.1']
    #allocation4 [shape = 's32[2]{0}', space=sflag, size = 0x8, scoped, tag = 'scoped memory for tpu_custom_call.1']
    #allocation5 [shape = 'u8[8192]{0}', space=vmem, size = 0x2000, scoped, tag = 'input window, operand 1']
    #allocation6 [shape = 's32[2]{0}', space=sflag, size = 0x8, scoped, tag = 'scoped memory for tpu_custom_call.1']
    #allocation7 [shape = 'u8[8192]{0}', space=vmem, size = 0x2000, scoped, tag = 'input window, operand 2']
    #allocation8 [shape = 'u8[8192]{0}', space=vmem, size = 0x2000, scoped, tag = 'input window, operand 3, single buffered']
    #allocation9 [shape = 's32[1]{0}', space=sflag, size = 0x4, scoped, tag = 'scoped memory for tpu_custom_call.1']
    #allocation10 [shape = 'u8[8192]{0}', space=vmem, size = 0x2000, scoped, tag = 'input window, operand 7, single buffered']
    #allocation11 [shape = 'u8[512]{0}', space=vmem, size = 0x400, scoped, tag = 'input window, operand 8, single buffered']
    #allocation12 [shape = 's32[1]{0}', space=sflag, size = 0x4, scoped, tag = 'scoped memory for tpu_custom_call.1']
    #allocation13 [shape = 'u8[8192]{0}', space=vmem, size = 0x2000, scoped, tag = 'output window, operand 0']
    %16 = vsyncpa [#allocation3], 0
    %s17 = scalar_lea.sflag [#allocation3], 1
    %18 = vsyncpa %s17, 0
    %19 = vsyncpa [#allocation6], 0
    %s20 = scalar_lea.sflag [#allocation6], 1
    %21 = vsyncpa %s20, 0
    %22 = vsyncpa [#allocation9], 0
    %23 = vsyncpa [#allocation12], 0
    %24 = vsyncpa [#allocation4], 0
    %s25 = scalar_lea.sflag [#allocation4], 1
    %26 = vsyncpa %s25, 0
    loop: start=0, step=1, limit=4
    $region2: #{tpu_custom_call.1} parent=1 // loop_pre_header
      _
    $region3: #{tpu_custom_call.1} parent=1 // loop_header
      %s28 = sphi 0, %s32
      %p29 = scmp.ge.s32.totalorder %s28, 4
      %s38 = sphi 0, %s40
      %s41 = sphi 0, %s38
      %s42 = sphi 0, %s41
      %s58 = sphi 0, %s42
      %s64 = sphi 0, %s66
      %s67 = sphi 0, %s64
      %s68 = sphi 0, %s67
      %s84 = sphi 0, %s68
      %s90 = sphi 0, %s92
      %s93 = sphi 0, %s90
      %s94 = sphi 0, %s93
      %s110 = sphi 0, %s94
      %s114 = sphi 0, %s114
      %s116 = sphi 0, %s114
      %s117 = sphi 0, %s116
      %s131 = sphi 0, %s117
      %s135 = sphi 0, %s135
      %s137 = sphi 0, %s135
      %s138 = sphi 0, %s137
      %s152 = sphi 0, %s138
      %s156 = sphi 0, %s156
      %s158 = sphi 0, %s156
      %s159 = sphi 0, %s158
      %s173 = sphi 0, %s159
      %s177 = sphi 0, %s177
      %s179 = sphi 0, %s177
      %s180 = sphi 0, %s179
      %s194 = sphi 0, %s180
      %s198 = sphi 0, %s198
      %s200 = sphi 0, %s198
      %s201 = sphi 0, %s200
      %s215 = sphi 0, %s201
      %s219 = sphi 0, %s219
      %s221 = sphi 0, %s219
      %s222 = sphi 0, %s221
      %s236 = sphi 0, %s222
      %s240 = sphi 0, %s240
      %s242 = sphi 0, %s240
      %s243 = sphi 0, %s242
      %s257 = sphi 0, %s243
      %s261 = sphi 0, %s261
      %s263 = sphi 0, %s261
      %s264 = sphi 0, %s263
      %s278 = sphi 0, %s264
      %s284 = sphi 0, %s286
      %s287 = sphi 0, %s284
      %s288 = sphi 0, %s287
      %s304 = sphi 0, %s288
    $region4: #{tpu_custom_call.1} parent=1 // loop_header_branch
      %31 = sbr.rel (%p29) target = $region8
    $region5: #{tpu_custom_call.1} parent=1 // loop_body
      %s33 = ssub.s32 %s28, 1
      %s34 = ssub.s32 %s28, 2
      %s35 = sadd.s32 %s28, 1
      %s36 = ssub.s32 %s28, %s35
      %p37 = scmp.eq.s32.totalorder %s36, 0
      %s39 = sadd.s32 %s38, 1
      %s40 = scalar_select %p37, %s38, %s39
      %p43 = pneg %p37
      %p44 = scmp.eq.s32.totalorder %s28, 1
      %p45 = por %p43, %p44
      %p46 = scmp.ne.s32.totalorder %s38, %s41
      %p47 = scmp.eq.s32.totalorder %s28, 0
      %p48 = por %p46, %p47
      %p49 = scmp.ne.s32.totalorder %s38, %s41
      %p50 = scmp.eq.s32.totalorder %s33, 1
      %p51 = por %p49, %p50
      %p52 = scmp.ne.s32.totalorder %s41, %s42
      %p53 = scmp.eq.s32.totalorder %s33, 0
      %p54 = por %p52, %p53
      %p55 = scmp.ne.s32.totalorder %s41, %s42
      %p56 = scmp.eq.s32.totalorder %s34, 1
      %p57 = por %p55, %p56
      %p59 = scmp.ne.s32.totalorder %s42, %s58
      %p60 = scmp.eq.s32.totalorder %s34, 0
      %p61 = por %p59, %p60
      %s62 = ssub.s32 %s28, %s35
      %p63 = scmp.eq.s32.totalorder %s62, 0
      %s65 = sadd.s32 %s64, 1
      %s66 = scalar_select %p63, %s64, %s65
      %p69 = pneg %p63
      %p70 = scmp.eq.s32.totalorder %s28, 1
      %p71 = por %p69, %p70
      %p72 = scmp.ne.s32.totalorder %s64, %s67
      %p73 = scmp.eq.s32.totalorder %s28, 0
      %p74 = por %p72, %p73
      %p75 = scmp.ne.s32.totalorder %s64, %s67
      %p76 = scmp.eq.s32.totalorder %s33, 1
      %p77 = por %p75, %p76
      %p78 = scmp.ne.s32.totalorder %s67, %s68
      %p79 = scmp.eq.s32.totalorder %s33, 0
      %p80 = por %p78, %p79
      %p81 = scmp.ne.s32.totalorder %s67, %s68
      %p82 = scmp.eq.s32.totalorder %s34, 1
      %p83 = por %p81, %p82
      %p85 = scmp.ne.s32.totalorder %s68, %s84
      %p86 = scmp.eq.s32.totalorder %s34, 0
      %p87 = por %p85, %p86
      %s88 = ssub.s32 %s28, %s35
      %p89 = scmp.eq.s32.totalorder %s88, 0
      %s91 = sadd.s32 %s90, 1
      %s92 = scalar_select %p89, %s90, %s91
      %p95 = pneg %p89
      %p96 = scmp.eq.s32.totalorder %s28, 1
      %p97 = por %p95, %p96
      %p98 = scmp.ne.s32.totalorder %s90, %s93
      %p99 = scmp.eq.s32.totalorder %s28, 0
      %p100 = por %p98, %p99
      %p101 = scmp.ne.s32.totalorder %s90, %s93
      %p102 = scmp.eq.s32.totalorder %s33, 1
      %p103 = por %p101, %p102
      %p104 = scmp.ne.s32.totalorder %s93, %s94
      %p105 = scmp.eq.s32.totalorder %s33, 0
      %p106 = por %p104, %p105
      %p107 = scmp.ne.s32.totalorder %s93, %s94
      %p108 = scmp.eq.s32.totalorder %s34, 1
      %p109 = por %p107, %p108
      %p111 = scmp.ne.s32.totalorder %s94, %s110
      %p112 = scmp.eq.s32.totalorder %s34, 0
      %p113 = por %p111, %p112
      %s115 = sadd.s32 %s114, 1
      %p118 = scmp.eq.s32.totalorder %s28, 1
      %p119 = scmp.ne.s32.totalorder %s114, %s116
      %p120 = scmp.eq.s32.totalorder %s28, 0
      %p121 = por %p119, %p120
      %p122 = scmp.ne.s32.totalorder %s114, %s116
      %p123 = scmp.eq.s32.totalorder %s33, 1
      %p124 = por %p122, %p123
      %p125 = scmp.ne.s32.totalorder %s116, %s117
      %p126 = scmp.eq.s32.totalorder %s33, 0
      %p127 = por %p125, %p126
      %p128 = scmp.ne.s32.totalorder %s116, %s117
      %p129 = scmp.eq.s32.totalorder %s34, 1
      %p130 = por %p128, %p129
      %p132 = scmp.ne.s32.totalorder %s117, %s131
      %p133 = scmp.eq.s32.totalorder %s34, 0
      %p134 = por %p132, %p133
      %s136 = sadd.s32 %s135, 1
      %p139 = scmp.eq.s32.totalorder %s28, 1
      %p140 = scmp.ne.s32.totalorder %s135, %s137
      %p141 = scmp.eq.s32.totalorder %s28, 0
      %p142 = por %p140, %p141
      %p143 = scmp.ne.s32.totalorder %s135, %s137
      %p144 = scmp.eq.s32.totalorder %s33, 1
      %p145 = por %p143, %p144
      %p146 = scmp.ne.s32.totalorder %s137, %s138
      %p147 = scmp.eq.s32.totalorder %s33, 0
      %p148 = por %p146, %p147
      %p149 = scmp.ne.s32.totalorder %s137, %s138
      %p150 = scmp.eq.s32.totalorder %s34, 1
      %p151 = por %p149, %p150
      %p153 = scmp.ne.s32.totalorder %s138, %s152
      %p154 = scmp.eq.s32.totalorder %s34, 0
      %p155 = por %p153, %p154
      %s157 = sadd.s32 %s156, 1
      %p160 = scmp.eq.s32.totalorder %s28, 1
      %p161 = scmp.ne.s32.totalorder %s156, %s158
      %p162 = scmp.eq.s32.totalorder %s28, 0
      %p163 = por %p161, %p162
      %p164 = scmp.ne.s32.totalorder %s156, %s158
      %p165 = scmp.eq.s32.totalorder %s33, 1
      %p166 = por %p164, %p165
      %p167 = scmp.ne.s32.totalorder %s158, %s159
      %p168 = scmp.eq.s32.totalorder %s33, 0
      %p169 = por %p167, %p168
      %p170 = scmp.ne.s32.totalorder %s158, %s159
      %p171 = scmp.eq.s32.totalorder %s34, 1
      %p172 = por %p170, %p171
      %p174 = scmp.ne.s32.totalorder %s159, %s173
      %p175 = scmp.eq.s32.totalorder %s34, 0
      %p176 = por %p174, %p175
      %s178 = sadd.s32 %s177, 1
      %p181 = scmp.eq.s32.totalorder %s28, 1
      %p182 = scmp.ne.s32.totalorder %s177, %s179
      %p183 = scmp.eq.s32.totalorder %s28, 0
      %p184 = por %p182, %p183
      %p185 = scmp.ne.s32.totalorder %s177, %s179
      %p186 = scmp.eq.s32.totalorder %s33, 1
      %p187 = por %p185, %p186
      %p188 = scmp.ne.s32.totalorder %s179, %s180
      %p189 = scmp.eq.s32.totalorder %s33, 0
      %p190 = por %p188, %p189
      %p191 = scmp.ne.s32.totalorder %s179, %s180
      %p192 = scmp.eq.s32.totalorder %s34, 1
      %p193 = por %p191, %p192
      %p195 = scmp.ne.s32.totalorder %s180, %s194
      %p196 = scmp.eq.s32.totalorder %s34, 0
      %p197 = por %p195, %p196
      %s199 = sadd.s32 %s198, 1
      %p202 = scmp.eq.s32.totalorder %s28, 1
      %p203 = scmp.ne.s32.totalorder %s198, %s200
      %p204 = scmp.eq.s32.totalorder %s28, 0
      %p205 = por %p203, %p204
      %p206 = scmp.ne.s32.totalorder %s198, %s200
      %p207 = scmp.eq.s32.totalorder %s33, 1
      %p208 = por %p206, %p207
      %p209 = scmp.ne.s32.totalorder %s200, %s201
      %p210 = scmp.eq.s32.totalorder %s33, 0
      %p211 = por %p209, %p210
      %p212 = scmp.ne.s32.totalorder %s200, %s201
      %p213 = scmp.eq.s32.totalorder %s34, 1
      %p214 = por %p212, %p213
      %p216 = scmp.ne.s32.totalorder %s201, %s215
      %p217 = scmp.eq.s32.totalorder %s34, 0
      %p218 = por %p216, %p217
      %s220 = sadd.s32 %s219, 1
      %p223 = scmp.eq.s32.totalorder %s28, 1
      %p224 = scmp.ne.s32.totalorder %s219, %s221
      %p225 = scmp.eq.s32.totalorder %s28, 0
      %p226 = por %p224, %p225
      %p227 = scmp.ne.s32.totalorder %s219, %s221
      %p228 = scmp.eq.s32.totalorder %s33, 1
      %p229 = por %p227, %p228
      %p230 = scmp.ne.s32.totalorder %s221, %s222
      %p231 = scmp.eq.s32.totalorder %s33, 0
      %p232 = por %p230, %p231
      %p233 = scmp.ne.s32.totalorder %s221, %s222
      %p234 = scmp.eq.s32.totalorder %s34, 1
      %p235 = por %p233, %p234
      %p237 = scmp.ne.s32.totalorder %s222, %s236
      %p238 = scmp.eq.s32.totalorder %s34, 0
      %p239 = por %p237, %p238
      %s241 = sadd.s32 %s240, 1
      %p244 = scmp.eq.s32.totalorder %s28, 1
      %p245 = scmp.ne.s32.totalorder %s240, %s242
      %p246 = scmp.eq.s32.totalorder %s28, 0
      %p247 = por %p245, %p246
      %p248 = scmp.ne.s32.totalorder %s240, %s242
      %p249 = scmp.eq.s32.totalorder %s33, 1
      %p250 = por %p248, %p249
      %p251 = scmp.ne.s32.totalorder %s242, %s243
      %p252 = scmp.eq.s32.totalorder %s33, 0
      %p253 = por %p251, %p252
      %p254 = scmp.ne.s32.totalorder %s242, %s243
      %p255 = scmp.eq.s32.totalorder %s34, 1
      %p256 = por %p254, %p255
      %p258 = scmp.ne.s32.totalorder %s243, %s257
      %p259 = scmp.eq.s32.totalorder %s34, 0
      %p260 = por %p258, %p259
      %s262 = sadd.s32 %s261, 1
      %p265 = scmp.eq.s32.totalorder %s28, 1
      %p266 = scmp.ne.s32.totalorder %s261, %s263
      %p267 = scmp.eq.s32.totalorder %s28, 0
      %p268 = por %p266, %p267
      %p269 = scmp.ne.s32.totalorder %s261, %s263
      %p270 = scmp.eq.s32.totalorder %s33, 1
      %p271 = por %p269, %p270
      %p272 = scmp.ne.s32.totalorder %s263, %s264
      %p273 = scmp.eq.s32.totalorder %s33, 0
      %p274 = por %p272, %p273
      %p275 = scmp.ne.s32.totalorder %s263, %s264
      %p276 = scmp.eq.s32.totalorder %s34, 1
      %p277 = por %p275, %p276
      %p279 = scmp.ne.s32.totalorder %s264, %s278
      %p280 = scmp.eq.s32.totalorder %s34, 0
      %p281 = por %p279, %p280
      %s282 = ssub.s32 %s28, %s35
      %p283 = scmp.eq.s32.totalorder %s282, 0
      %s285 = sadd.s32 %s284, 1
      %s286 = scalar_select %p283, %s284, %s285
      %p289 = pneg %p283
      %p290 = scmp.eq.s32.totalorder %s28, 1
      %p291 = por %p289, %p290
      %p292 = scmp.ne.s32.totalorder %s284, %s287
      %p293 = scmp.eq.s32.totalorder %s28, 0
      %p294 = por %p292, %p293
      %p295 = scmp.ne.s32.totalorder %s284, %s287
      %p296 = scmp.eq.s32.totalorder %s33, 1
      %p297 = por %p295, %p296
      %p298 = scmp.ne.s32.totalorder %s287, %s288
      %p299 = scmp.eq.s32.totalorder %s33, 0
      %p300 = por %p298, %p299
      %p301 = scmp.ne.s32.totalorder %s287, %s288
      %p302 = scmp.eq.s32.totalorder %s34, 1
      %p303 = por %p301, %p302
      %p305 = scmp.ne.s32.totalorder %s288, %s304
      %p306 = scmp.eq.s32.totalorder %s34, 0
      %p307 = por %p305, %p306
      %p308 = scmp.le.s32.totalorder 1, %s28
      %p309 = scmp.lt.s32.totalorder %s28, 3
      %p310 = pnand %p308, %p309
      %p311 = pneg %p310
      // Predicated region
      $region9: #{tpu_custom_call.1} parent=5 // pred_check
        _
      $region10: #{tpu_custom_call.1} parent=5 // pred_check_branch
        %313 = sbr.rel (%p310) target = $region12
      $region11: #{tpu_custom_call.1} parent=5 // pred_region
        %s314 = ssub.s32 %s28, 1
        // Predicated region
        $region13: #{tpu_custom_call.1} parent=11 // pred_check
          %p315 = pneg %p127
        $region14: #{tpu_custom_call.1} parent=11 // pred_check_branch
          %317 = sbr.rel (%p315) target = $region16
        $region15: #{tpu_custom_call.1} parent=11 // pred_region
          %s319 = ssub.s32 256, 256
          %320 = vsyncadd [#allocation9], %s319
          %s321 = sshll.u32 [#allocation8], 4
          %s322 = int_to_ptr.vmem [resolvable:$true] %s321
          %327 = dma.hbm_to_vmem [thread:$0]  %s3, 256, %s322, [#allocation9], 64, 64, 4
        $region16: #{tpu_custom_call.1} parent=11 // pred_fallthru
          _
        // Predicated region
        $region17: #{tpu_custom_call.1} parent=11 // pred_check
          %p328 = pneg %p148
        $region18: #{tpu_custom_call.1} parent=11 // pred_check_branch
          %330 = sbr.rel (%p328) target = $region20
        $region19: #{tpu_custom_call.1} parent=11 // pred_region
          _
        $region20: #{tpu_custom_call.1} parent=11 // pred_fallthru
          _
        // Predicated region
        $region21: #{tpu_custom_call.1} parent=11 // pred_check
          %p331 = pneg %p169
        $region22: #{tpu_custom_call.1} parent=11 // pred_check_branch
          %333 = sbr.rel (%p331) target = $region24
        $region23: #{tpu_custom_call.1} parent=11 // pred_region
          _
        $region24: #{tpu_custom_call.1} parent=11 // pred_fallthru
          _
        // Predicated region
        $region25: #{tpu_custom_call.1} parent=11 // pred_check
          %p334 = pneg %p190
        $region26: #{tpu_custom_call.1} parent=11 // pred_check_branch
          %336 = sbr.rel (%p334) target = $region28
        $region27: #{tpu_custom_call.1} parent=11 // pred_region
          _
        $region28: #{tpu_custom_call.1} parent=11 // pred_fallthru
          _
        // Predicated region
        $region29: #{tpu_custom_call.1} parent=11 // pred_check
          %p337 = pneg %p211
        $region30: #{tpu_custom_call.1} parent=11 // pred_check_branch
          %339 = sbr.rel (%p337) target = $region32
        $region31: #{tpu_custom_call.1} parent=11 // pred_region
          %s341 = ssub.s32 256, 256
          %342 = vsyncadd [#allocation9], %s341
          %s343 = sshll.u32 [#allocation10], 4
          %s344 = int_to_ptr.vmem [resolvable:$true] %s343
          %349 = dma.hbm_to_vmem [thread:$0]  %s7, 256, %s344, [#allocation9], 64, 64, 4
        $region32: #{tpu_custom_call.1} parent=11 // pred_fallthru
          _
        // Predicated region
        $region33: #{tpu_custom_call.1} parent=11 // pred_check
          %p350 = pneg %p232
        $region34: #{tpu_custom_call.1} parent=11 // pred_check_branch
          %352 = sbr.rel (%p350) target = $region36
        $region35: #{tpu_custom_call.1} parent=11 // pred_region
          %s354 = ssub.s32 16, 16
          %355 = vsyncadd [#allocation12], %s354
          %s357 = sshll.u32 [#allocation11], 4
          %s358 = int_to_ptr.vmem [resolvable:$true] %s357
          %360 = dma.hbm_to_vmem [thread:$0]  %s8, 16, %s358, [#allocation12]
        $region36: #{tpu_custom_call.1} parent=11 // pred_fallthru
          _
        // Predicated region
        $region37: #{tpu_custom_call.1} parent=11 // pred_check
          %p361 = pneg %p253
        $region38: #{tpu_custom_call.1} parent=11 // pred_check_branch
          %363 = sbr.rel (%p361) target = $region40
        $region39: #{tpu_custom_call.1} parent=11 // pred_region
          _
        $region40: #{tpu_custom_call.1} parent=11 // pred_fallthru
          _
        // Predicated region
        $region41: #{tpu_custom_call.1} parent=11 // pred_check
          %p364 = pneg %p274
        $region42: #{tpu_custom_call.1} parent=11 // pred_check_branch
          %366 = sbr.rel (%p364) target = $region44
        $region43: #{tpu_custom_call.1} parent=11 // pred_region
          _
        $region44: #{tpu_custom_call.1} parent=11 // pred_fallthru
          _
      $region12: #{tpu_custom_call.1} parent=5 // pred_fallthru
        _
      %p367 = scmp.lt.s32.totalorder %s28, 2
      // Predicated region
      $region45: #{tpu_custom_call.1} parent=5 // pred_check
        %p368 = pneg %p367
      $region46: #{tpu_custom_call.1} parent=5 // pred_check_branch
        %370 = sbr.rel (%p368) target = $region48
      $region47: #{tpu_custom_call.1} parent=5 // pred_region
        // Predicated region
        $region49: #{tpu_custom_call.1} parent=47 // pred_check
          %p371 = pneg %p48
        $region50: #{tpu_custom_call.1} parent=47 // pred_check_branch
          %373 = sbr.rel (%p371) target = $region52
        $region51: #{tpu_custom_call.1} parent=47 // pred_region
          %s374 = sand.u32 %s38, 1
          %s375 = scalar_lea.sflag [#allocation3], %s374
          %s376 = sand.u32 %s38, 1
          %s377 = smul.addr %s376, 8
          %s378 = scalar_lea.vmem [#allocation2], %s377
          %s380 = ssub.s32 128, 128
          %381 = vsyncadd %s375, %s380
          %s382 = smul.addr %s28, 128
          %s383 = scalar_lea.hbm %s0, %s382
          %s385 = sshll.u32 %s378, 4
          %s386 = int_to_ptr.vmem [resolvable:$true] %s385
          %388 = dma.hbm_to_vmem [thread:$0]  %s383, 128, %s386, %s375
        $region52: #{tpu_custom_call.1} parent=47 // pred_fallthru
          _
        // Predicated region
        $region53: #{tpu_custom_call.1} parent=47 // pred_check
          %p389 = pneg %p74
        $region54: #{tpu_custom_call.1} parent=47 // pred_check_branch
          %391 = sbr.rel (%p389) target = $region56
        $region55: #{tpu_custom_call.1} parent=47 // pred_region
          %s392 = sand.u32 %s28, 1
          %s393 = scalar_lea.sflag [#allocation6], %s392
          %s394 = sand.u32 %s64, 1
          %s395 = smul.addr %s394, 8
          %s396 = scalar_lea.vmem [#allocation5], %s395
          %s398 = ssub.s32 128, 128
          %399 = vsyncadd %s393, %s398
          %s400 = smul.addr %s28, 128
          %s401 = scalar_lea.hbm %s1, %s400
          %s403 = sshll.u32 %s396, 4
          %s404 = int_to_ptr.vmem [resolvable:$true] %s403
          %406 = dma.hbm_to_vmem [thread:$0]  %s401, 128, %s404, %s393
        $region56: #{tpu_custom_call.1} parent=47 // pred_fallthru
          _
        // Predicated region
        $region57: #{tpu_custom_call.1} parent=47 // pred_check
          %p407 = pneg %p100
        $region58: #{tpu_custom_call.1} parent=47 // pred_check_branch
          %409 = sbr.rel (%p407) target = $region60
        $region59: #{tpu_custom_call.1} parent=47 // pred_region
          %s410 = sand.u32 %s28, 1
          %s411 = scalar_lea.sflag [#allocation6], %s410
          %s412 = sand.u32 %s90, 1
          %s413 = smul.addr %s412, 8
          %s414 = scalar_lea.vmem [#allocation7], %s413
          %s416 = ssub.s32 128, 128
          %417 = vsyncadd %s411, %s416
          %s418 = smul.addr %s28, 128
          %s419 = scalar_lea.hbm %s2, %s418
          %s421 = sshll.u32 %s414, 4
          %s422 = int_to_ptr.vmem [resolvable:$true] %s421
          %424 = dma.hbm_to_vmem [thread:$0]  %s419, 128, %s422, %s411
        $region60: #{tpu_custom_call.1} parent=47 // pred_fallthru
          _
      $region48: #{tpu_custom_call.1} parent=5 // pred_fallthru
        _
      %p425 = scmp.le.s32.totalorder 1, %s28
      %p426 = scmp.lt.s32.totalorder %s28, 3
      %p427 = pnand %p425, %p426
      %p428 = pneg %p427
      // Predicated region
      $region61: #{tpu_custom_call.1} parent=5 // pred_check
        _
      $region62: #{tpu_custom_call.1} parent=5 // pred_check_branch
        %430 = sbr.rel (%p427) target = $region64
      $region63: #{tpu_custom_call.1} parent=5 // pred_region
        %s431 = ssub.s32 %s28, 1
        %s432 = sand.u32 %s41, 1
        %s433 = scalar_lea.sflag [#allocation3], %s432
        %s434 = sand.u32 %s41, 1
        %s435 = smul.addr %s434, 8
        %s436 = scalar_lea.vmem [#allocation2], %s435
        // Predicated region
        $region65: #{tpu_custom_call.1} parent=63 // pred_check
          %p437 = pneg %p54
        $region66: #{tpu_custom_call.1} parent=63 // pred_check_branch
          %439 = sbr.rel (%p437) target = $region68
        $region67: #{tpu_custom_call.1} parent=63 // pred_region
          %440 = dma.done %s433, 128
        $region68: #{tpu_custom_call.1} parent=63 // pred_fallthru
          _
        %s441 = sand.u32 %s33, 1
        %s442 = scalar_lea.sflag [#allocation6], %s441
        %s443 = sand.u32 %s67, 1
        %s444 = smul.addr %s443, 8
        %s445 = scalar_lea.vmem [#allocation5], %s444
        // Predicated region
        $region69: #{tpu_custom_call.1} parent=63 // pred_check
          %p446 = pneg %p80
        $region70: #{tpu_custom_call.1} parent=63 // pred_check_branch
          %448 = sbr.rel (%p446) target = $region72
        $region71: #{tpu_custom_call.1} parent=63 // pred_region
          %449 = dma.done %s442, 128
        $region72: #{tpu_custom_call.1} parent=63 // pred_fallthru
          _
        %s450 = sand.u32 %s33, 1
        %s451 = scalar_lea.sflag [#allocation6], %s450
        %s452 = sand.u32 %s93, 1
        %s453 = smul.addr %s452, 8
        %s454 = scalar_lea.vmem [#allocation7], %s453
        // Predicated region
        $region73: #{tpu_custom_call.1} parent=63 // pred_check
          %p455 = pneg %p106
        $region74: #{tpu_custom_call.1} parent=63 // pred_check_branch
          %457 = sbr.rel (%p455) target = $region76
        $region75: #{tpu_custom_call.1} parent=63 // pred_region
          %458 = dma.done %s451, 128
        $region76: #{tpu_custom_call.1} parent=63 // pred_fallthru
          _
        // Predicated region
        $region77: #{tpu_custom_call.1} parent=63 // pred_check
          %p459 = pneg %p127
        $region78: #{tpu_custom_call.1} parent=63 // pred_check_branch
          %461 = sbr.rel (%p459) target = $region80
        $region79: #{tpu_custom_call.1} parent=63 // pred_region
          %462 = dma.done [#allocation9], 256
        $region80: #{tpu_custom_call.1} parent=63 // pred_fallthru
          _
        // Predicated region
        $region81: #{tpu_custom_call.1} parent=63 // pred_check
          %p463 = pneg %p211
        $region82: #{tpu_custom_call.1} parent=63 // pred_check_branch
          %465 = sbr.rel (%p463) target = $region84
        $region83: #{tpu_custom_call.1} parent=63 // pred_region
          %466 = dma.done [#allocation9], 256
        $region84: #{tpu_custom_call.1} parent=63 // pred_fallthru
          _
        // Predicated region
        $region85: #{tpu_custom_call.1} parent=63 // pred_check
          %p467 = pneg %p232
        $region86: #{tpu_custom_call.1} parent=63 // pred_check_branch
          %469 = sbr.rel (%p467) target = $region88
        $region87: #{tpu_custom_call.1} parent=63 // pred_region
          %470 = dma.done [#allocation12], 16
        $region88: #{tpu_custom_call.1} parent=63 // pred_fallthru
          _
        %s471 = sand.u32 %s41, 1
        %s472 = scalar_lea.sflag [#allocation3], %s471
        %s473 = sand.u32 %s41, 1
        %s474 = smul.addr %s473, 8
        %s475 = scalar_lea.vmem [#allocation2], %s474
        %p476 = pneg %p54
        %p477 = pneg %p51
        %s478 = sand.u32 %s33, 1
        %s479 = scalar_lea.sflag [#allocation6], %s478
        %s480 = sand.u32 %s67, 1
        %s481 = smul.addr %s480, 8
        %s482 = scalar_lea.vmem [#allocation5], %s481
        %p483 = pneg %p80
        %p484 = pneg %p77
        %s485 = sand.u32 %s33, 1
        %s486 = scalar_lea.sflag [#allocation6], %s485
        %s487 = sand.u32 %s93, 1
        %s488 = smul.addr %s487, 8
        %s489 = scalar_lea.vmem [#allocation7], %s488
        %p490 = pneg %p106
        %p491 = pneg %p103
        %p492 = pneg %p127
        %p493 = pneg %p124
        %p494 = pneg %p148
        %p495 = pneg %p145
        %p496 = pneg %p169
        %p497 = pneg %p166
        %p498 = pneg %p190
        %p499 = pneg %p187
        %p500 = pneg %p211
        %p501 = pneg %p208
        %p502 = pneg %p232
        %p503 = pneg %p229
        %p504 = pneg %p253
        %p505 = pneg %p250
        %p506 = pneg %p274
        %p507 = pneg %p271
        %p508 = pneg %p300
        %p509 = pneg %p297
        %s510 = sand.u32 %s287, 1
        %s511 = scalar_lea.sflag [#allocation4], %s510
        %s512 = sand.u32 %s287, 1
        %s513 = smul.addr %s512, 8
        %s514 = scalar_lea.vmem [#allocation13], %s513
        %v516 = vld [vmem:[%s436] sm:$0xff]
        %v517 = vpack.c.bf16 %v516, %v516
        %v518 = vld [vmem:[%s445] sm:$0xff]
        %v519 = vpack.c.bf16 %v518, %v518
        %v520 = vld [vmem:[%s454] sm:$0xff]
        %v521 = vpack.c.bf16 %v520, %v520
        %v522 = vld [vmem:[#allocation8] sm:$0xf]
        %v523 = vld [vmem:[#allocation8 + $0x4] sm:$0xf]
        %v524 = vld [vmem:[#allocation8 + $0x8] sm:$0xf]
        %v525 = vld [vmem:[#allocation8 + $0xc] sm:$0xf]
        %v526 = vld [vmem:[%s4] sm:$0x1]
        %v528 = vlaneseq
        %v529 = vshrl.u32 %v528, 7
        %v530 = vsub.s32 0, %v529
        %v531 = vrot.slane %v526, %v530
        %v537 = vunpack.c.l.b16 %v522
        %v538 = vunpack.c.l.b16 %v523
        %v539 = vunpack.c.l.b16 %v524
        %v540 = vunpack.c.l.b16 %v525
        %v541 = vpack.c.b16 %v538, %v537
        %v542 = vpack.c.b16 %v540, %v539
        %vm545 = vcmask 261120
        %v547 = vsel %vm545, %v517, 0
        %549 = vmatprep.subr.bf16.mxu0 0
        %550 = vmatpush1.bf16.msra.mxu0 %v541
        %551 = vmatprep.subr.bf16.mxu0 0
        %552 = vmatpush1.bf16.msra.mxu0 %v542
        %553 = vmatprep.subr.bf16.mxu0 0
        %554 = vmatpush1.bf16.msra.mxu0 0
        %555 = vmatprep.subr.bf16.mxu0 0
        %556 = vmatpush1.bf16.msra.mxu0 0
        %557 = vmatprep.subr.bf16.mxu0 0
        %558 = vmatpush1.bf16.msra.mxu0 0
        %559 = vmatprep.subr.bf16.mxu0 0
        %560 = vmatpush1.bf16.msra.mxu0 0
        %561 = vmatprep.subr.bf16.mxu0 0
        %562 = vmatpush1.bf16.msra.mxu0 0
        %563 = vmatprep.subr.bf16.mxu0 0
        %564 = vmatpush1.bf16.msra.mxu0 0
        %565 = vmatprep.subr.bf16.mxu0 0
        %566 = vmatpush1.bf16.msra.mxu0 0
        %567 = vmatprep.subr.bf16.mxu0 0
        %568 = vmatpush1.bf16.msra.mxu0 0
        %569 = vmatprep.subr.bf16.mxu0 0
        %570 = vmatpush1.bf16.msra.mxu0 0
        %571 = vmatprep.subr.bf16.mxu0 0
        %572 = vmatpush1.bf16.msra.mxu0 0
        %573 = vmatprep.subr.bf16.mxu0 0
        %574 = vmatpush1.bf16.msra.mxu0 0
        %575 = vmatprep.subr.bf16.mxu0 0
        %576 = vmatpush1.bf16.msra.mxu0 0
        %577 = vmatprep.subr.bf16.mxu0 0
        %578 = vmatpush1.bf16.msra.mxu0 0
        %579 = vmatprep.subr.bf16.mxu0 0
        %580 = vmatpush1.bf16.msra.mxu0 0
        %581 = vmatprep.mubr.bf16.mxu0 0
        %582 = vmatmul.mubr.bf16.gmra.mrb[0].mxu0 %v547
        %v583 = vpop.f32.mrb[0].mxu0
        %v584 = vadd.f32 %v531, %v583
        %v585 = vpop.f32.mrb[0].mxu0
        %v586 = vpop.f32.mrb[0].mxu0
        %v587 = vpop.f32.mrb[0].mxu0
        %588 = vdwg.mxu0
        %v589 = vld [vmem:[%s5] sm:$0xf]
        %v590 = vld [vmem:[%s5 + $0x4] sm:$0xf]
        %v591 = vld [vmem:[%s5 + $0x8] sm:$0xf]
        %v592 = vld [vmem:[%s5 + $0xc] sm:$0xf]
        %v593 = vld [vmem:[%s6] sm:$0x1]
        %v595 = vlaneseq
        %v596 = vshrl.u32 %v595, 7
        %v597 = vsub.s32 0, %v596
        %v598 = vrot.slane %v593, %v597
        %v604 = vunpack.c.l.b16 %v589
        %v605 = vunpack.c.l.b16 %v590
        %v606 = vunpack.c.l.b16 %v591
        %v607 = vunpack.c.l.b16 %v592
        %v608 = vpack.c.b16 %v605, %v604
        %v609 = vpack.c.b16 %v607, %v606
        %v613 = vsel %vm545, %v519, 0
        %615 = vmatprep.subr.bf16.mxu0 0
        %616 = vmatpush1.bf16.msra.mxu0 %v608
        %617 = vmatprep.subr.bf16.mxu0 0
        %618 = vmatpush1.bf16.msra.mxu0 %v609
        %619 = vmatprep.subr.bf16.mxu0 0
        %620 = vmatpush1.bf16.msra.mxu0 0
        %621 = vmatprep.subr.bf16.mxu0 0
        %622 = vmatpush1.bf16.msra.mxu0 0
        %623 = vmatprep.subr.bf16.mxu0 0
        %624 = vmatpush1.bf16.msra.mxu0 0
        %625 = vmatprep.subr.bf16.mxu0 0
        %626 = vmatpush1.bf16.msra.mxu0 0
        %627 = vmatprep.subr.bf16.mxu0 0
        %628 = vmatpush1.bf16.msra.mxu0 0
        %629 = vmatprep.subr.bf16.mxu0 0
        %630 = vmatpush1.bf16.msra.mxu0 0
        %631 = vmatprep.subr.bf16.mxu0 0
        %632 = vmatpush1.bf16.msra.mxu0 0
        %633 = vmatprep.subr.bf16.mxu0 0
        %634 = vmatpush1.bf16.msra.mxu0 0
        %635 = vmatprep.subr.bf16.mxu0 0
        %636 = vmatpush1.bf16.msra.mxu0 0
        %637 = vmatprep.subr.bf16.mxu0 0
        %638 = vmatpush1.bf16.msra.mxu0 0
        %639 = vmatprep.subr.bf16.mxu0 0
        %640 = vmatpush1.bf16.msra.mxu0 0
        %641 = vmatprep.subr.bf16.mxu0 0
        %642 = vmatpush1.bf16.msra.mxu0 0
        %643 = vmatprep.subr.bf16.mxu0 0
        %644 = vmatpush1.bf16.msra.mxu0 0
        %645 = vmatprep.subr.bf16.mxu0 0
        %646 = vmatpush1.bf16.msra.mxu0 0
        %647 = vmatprep.mubr.bf16.mxu0 0
        %648 = vmatmul.mubr.bf16.gmra.mrb[0].mxu0 %v613
        %v649 = vpop.f32.mrb[0].mxu0
        %v650 = vadd.f32 %v598, %v649
        %v651 = vpop.f32.mrb[0].mxu0
        %v652 = vpop.f32.mrb[0].mxu0
        %v653 = vpop.f32.mrb[0].mxu0
        %654 = vdwg.mxu0
        %v655 = vld [vmem:[#allocation10] sm:$0xf]
        %v656 = vld [vmem:[#allocation10 + $0x4] sm:$0xf]
        %v657 = vld [vmem:[#allocation10 + $0x8] sm:$0xf]
        %v658 = vld [vmem:[#allocation10 + $0xc] sm:$0xf]
        %v659 = vld [vmem:[#allocation11] sm:$0x1]
        %v661 = vlaneseq
        %v662 = vshrl.u32 %v661, 7
        %v663 = vsub.s32 0, %v662
        %v664 = vrot.slane %v659, %v663
        %v670 = vunpack.c.l.b16 %v655
        %v671 = vunpack.c.l.b16 %v656
        %v672 = vunpack.c.l.b16 %v657
        %v673 = vunpack.c.l.b16 %v658
        %v674 = vpack.c.b16 %v671, %v670
        %v675 = vpack.c.b16 %v673, %v672
        %v679 = vsel %vm545, %v521, 0
        %681 = vmatprep.subr.bf16.mxu0 0
        %682 = vmatpush1.bf16.msra.mxu0 %v674
        %683 = vmatprep.subr.bf16.mxu0 0
        %684 = vmatpush1.bf16.msra.mxu0 %v675
        %685 = vmatprep.subr.bf16.mxu0 0
        %686 = vmatpush1.bf16.msra.mxu0 0
        %687 = vmatprep.subr.bf16.mxu0 0
        %688 = vmatpush1.bf16.msra.mxu0 0
        %689 = vmatprep.subr.bf16.mxu0 0
        %690 = vmatpush1.bf16.msra.mxu0 0
        %691 = vmatprep.subr.bf16.mxu0 0
        %692 = vmatpush1.bf16.msra.mxu0 0
        %693 = vmatprep.subr.bf16.mxu0 0
        %694 = vmatpush1.bf16.msra.mxu0 0
        %695 = vmatprep.subr.bf16.mxu0 0
        %696 = vmatpush1.bf16.msra.mxu0 0
        %697 = vmatprep.subr.bf16.mxu0 0
        %698 = vmatpush1.bf16.msra.mxu0 0
        %699 = vmatprep.subr.bf16.mxu0 0
        %700 = vmatpush1.bf16.msra.mxu0 0
        %701 = vmatprep.subr.bf16.mxu0 0
        %702 = vmatpush1.bf16.msra.mxu0 0
        %703 = vmatprep.subr.bf16.mxu0 0
        %704 = vmatpush1.bf16.msra.mxu0 0
        %705 = vmatprep.subr.bf16.mxu0 0
        %706 = vmatpush1.bf16.msra.mxu0 0
        %707 = vmatprep.subr.bf16.mxu0 0
        %708 = vmatpush1.bf16.msra.mxu0 0
        %709 = vmatprep.subr.bf16.mxu0 0
        %710 = vmatpush1.bf16.msra.mxu0 0
        %711 = vmatprep.subr.bf16.mxu0 0
        %712 = vmatpush1.bf16.msra.mxu0 0
        %713 = vmatprep.mubr.bf16.mxu0 0
        %714 = vmatmul.mubr.bf16.gmra.mrb[0].mxu0 %v679
        %v715 = vpop.f32.mrb[0].mxu0
        %v716 = vadd.f32 %v664, %v715
        %v717 = vpop.f32.mrb[0].mxu0
        %v718 = vpop.f32.mrb[0].mxu0
        %v719 = vpop.f32.mrb[0].mxu0
        %720 = vdwg.mxu0
        %722 = vrot.lane.b32.xlu0 %v584, 120
        %v723 = vpop.permute.xlu0 %722
        %725 = vrot.lane.b32.xlu0 %v584, 112
        %v726 = vpop.permute.xlu0 %725
        %728 = vrot.lane.b32.xlu0 %v584, 104
        %v729 = vpop.permute.xlu0 %728
        %v731 = vpack.c.bf16 %v584, %v584
        %v732 = vpack.c.bf16 %v723, %v723
        %v733 = vpack.c.bf16 %v726, %v726
        %v734 = vpack.c.bf16 %v729, %v729
        %736 = vrot.lane.b32.xlu0 %v650, 120
        %v737 = vpop.permute.xlu0 %736
        %739 = vrot.lane.b32.xlu0 %v650, 112
        %v740 = vpop.permute.xlu0 %739
        %742 = vrot.lane.b32.xlu0 %v650, 104
        %v743 = vpop.permute.xlu0 %742
        %v745 = vpack.c.bf16 %v650, %v650
        %v746 = vpack.c.bf16 %v737, %v737
        %v747 = vpack.c.bf16 %v740, %v740
        %v748 = vpack.c.bf16 %v743, %v743
        %750 = vrot.lane.b32.xlu0 %v716, 120
        %v751 = vpop.permute.xlu0 %750
        %753 = vrot.lane.b32.xlu0 %v716, 112
        %v754 = vpop.permute.xlu0 %753
        %756 = vrot.lane.b32.xlu0 %v716, 104
        %v757 = vpop.permute.xlu0 %756
        %v759 = vpack.c.bf16 %v716, %v716
        %v760 = vpack.c.bf16 %v751, %v751
        %v761 = vpack.c.bf16 %v754, %v754
        %v762 = vpack.c.bf16 %v757, %v757
        %vm763 = vcmask 64512
        %v765 = vsel %vm763, %v731, 0
        %v768 = vsel %vm763, %v745, 0
        %770 = vmatprep.subr.bf16.mxu0 0
        %771 = vmatpush1.bf16.xpose.msra.mxu0 %v768
        %772 = vmatprep.subr.bf16.mxu0 0
        %773 = vmatpush1.bf16.xpose.msra.mxu0 0
        %774 = vmatprep.subr.bf16.mxu0 0
        %775 = vmatpush1.bf16.xpose.msra.mxu0 0
        %776 = vmatprep.subr.bf16.mxu0 0
        %777 = vmatpush1.bf16.xpose.msra.mxu0 0
        %778 = vmatprep.subr.bf16.mxu0 0
        %779 = vmatpush1.bf16.xpose.msra.mxu0 0
        %780 = vmatprep.subr.bf16.mxu0 0
        %781 = vmatpush1.bf16.xpose.msra.mxu0 0
        %782 = vmatprep.subr.bf16.mxu0 0
        %783 = vmatpush1.bf16.xpose.msra.mxu0 0
        %784 = vmatprep.subr.bf16.mxu0 0
        %785 = vmatpush1.bf16.xpose.msra.mxu0 0
        %786 = vmatprep.subr.bf16.mxu0 0
        %787 = vmatpush1.bf16.xpose.msra.mxu0 0
        %788 = vmatprep.subr.bf16.mxu0 0
        %789 = vmatpush1.bf16.xpose.msra.mxu0 0
        %790 = vmatprep.subr.bf16.mxu0 0
        %791 = vmatpush1.bf16.xpose.msra.mxu0 0
        %792 = vmatprep.subr.bf16.mxu0 0
        %793 = vmatpush1.bf16.xpose.msra.mxu0 0
        %794 = vmatprep.subr.bf16.mxu0 0
        %795 = vmatpush1.bf16.xpose.msra.mxu0 0
        %796 = vmatprep.subr.bf16.mxu0 0
        %797 = vmatpush1.bf16.xpose.msra.mxu0 0
        %798 = vmatprep.subr.bf16.mxu0 0
        %799 = vmatpush1.bf16.xpose.msra.mxu0 0
        %800 = vmatprep.subr.bf16.mxu0 0
        %801 = vmatpush1.bf16.xpose.msra.mxu0 0
        %802 = vmatprep.mubr.bf16.mxu0 0
        %803 = vmatmul.mubr.bf16.gmra.mrb[0].mxu0 %v765
        %v804 = vpop.f32.mrb[0].mxu0
        %v805 = vadd.f32 0.0, %v804
        %v806 = vpop.f32.mrb[0].mxu0
        %v807 = vpop.f32.mrb[0].mxu0
        %v808 = vpop.f32.mrb[0].mxu0
        %809 = vdwg.mxu0
        %v811 = vsel %vm763, %v732, 0
        %v814 = vsel %vm763, %v746, 0
        %816 = vmatprep.subr.bf16.mxu0 0
        %817 = vmatpush1.bf16.xpose.msra.mxu0 %v814
        %818 = vmatprep.subr.bf16.mxu0 0
        %819 = vmatpush1.bf16.xpose.msra.mxu0 0
        %820 = vmatprep.subr.bf16.mxu0 0
        %821 = vmatpush1.bf16.xpose.msra.mxu0 0
        %822 = vmatprep.subr.bf16.mxu0 0
        %823 = vmatpush1.bf16.xpose.msra.mxu0 0
        %824 = vmatprep.subr.bf16.mxu0 0
        %825 = vmatpush1.bf16.xpose.msra.mxu0 0
        %826 = vmatprep.subr.bf16.mxu0 0
        %827 = vmatpush1.bf16.xpose.msra.mxu0 0
        %828 = vmatprep.subr.bf16.mxu0 0
        %829 = vmatpush1.bf16.xpose.msra.mxu0 0
        %830 = vmatprep.subr.bf16.mxu0 0
        %831 = vmatpush1.bf16.xpose.msra.mxu0 0
        %832 = vmatprep.subr.bf16.mxu0 0
        %833 = vmatpush1.bf16.xpose.msra.mxu0 0
        %834 = vmatprep.subr.bf16.mxu0 0
        %835 = vmatpush1.bf16.xpose.msra.mxu0 0
        %836 = vmatprep.subr.bf16.mxu0 0
        %837 = vmatpush1.bf16.xpose.msra.mxu0 0
        %838 = vmatprep.subr.bf16.mxu0 0
        %839 = vmatpush1.bf16.xpose.msra.mxu0 0
        %840 = vmatprep.subr.bf16.mxu0 0
        %841 = vmatpush1.bf16.xpose.msra.mxu0 0
        %842 = vmatprep.subr.bf16.mxu0 0
        %843 = vmatpush1.bf16.xpose.msra.mxu0 0
        %844 = vmatprep.subr.bf16.mxu0 0
        %845 = vmatpush1.bf16.xpose.msra.mxu0 0
        %846 = vmatprep.subr.bf16.mxu0 0
        %847 = vmatpush1.bf16.xpose.msra.mxu0 0
        %848 = vmatprep.mubr.bf16.mxu0 0
        %849 = vmatmul.mubr.bf16.gmra.mrb[0].mxu0 %v811
        %v850 = vpop.f32.mrb[0].mxu0
        %v851 = vadd.f32 0.0, %v850
        %v852 = vpop.f32.mrb[0].mxu0
        %v853 = vpop.f32.mrb[0].mxu0
        %v854 = vpop.f32.mrb[0].mxu0
        %855 = vdwg.mxu0
        %v857 = vsel %vm763, %v733, 0
        %v860 = vsel %vm763, %v747, 0
        %862 = vmatprep.subr.bf16.mxu0 0
        %863 = vmatpush1.bf16.xpose.msra.mxu0 %v860
        %864 = vmatprep.subr.bf16.mxu0 0
        %865 = vmatpush1.bf16.xpose.msra.mxu0 0
        %866 = vmatprep.subr.bf16.mxu0 0
        %867 = vmatpush1.bf16.xpose.msra.mxu0 0
        %868 = vmatprep.subr.bf16.mxu0 0
        %869 = vmatpush1.bf16.xpose.msra.mxu0 0
        %870 = vmatprep.subr.bf16.mxu0 0
        %871 = vmatpush1.bf16.xpose.msra.mxu0 0
        %872 = vmatprep.subr.bf16.mxu0 0
        %873 = vmatpush1.bf16.xpose.msra.mxu0 0
        %874 = vmatprep.subr.bf16.mxu0 0
        %875 = vmatpush1.bf16.xpose.msra.mxu0 0
        %876 = vmatprep.subr.bf16.mxu0 0
        %877 = vmatpush1.bf16.xpose.msra.mxu0 0
        %878 = vmatprep.subr.bf16.mxu0 0
        %879 = vmatpush1.bf16.xpose.msra.mxu0 0
        %880 = vmatprep.subr.bf16.mxu0 0
        %881 = vmatpush1.bf16.xpose.msra.mxu0 0
        %882 = vmatprep.subr.bf16.mxu0 0
        %883 = vmatpush1.bf16.xpose.msra.mxu0 0
        %884 = vmatprep.subr.bf16.mxu0 0
        %885 = vmatpush1.bf16.xpose.msra.mxu0 0
        %886 = vmatprep.subr.bf16.mxu0 0
        %887 = vmatpush1.bf16.xpose.msra.mxu0 0
        %888 = vmatprep.subr.bf16.mxu0 0
        %889 = vmatpush1.bf16.xpose.msra.mxu0 0
        %890 = vmatprep.subr.bf16.mxu0 0
        %891 = vmatpush1.bf16.xpose.msra.mxu0 0
        %892 = vmatprep.subr.bf16.mxu0 0
        %893 = vmatpush1.bf16.xpose.msra.mxu0 0
        %894 = vmatprep.mubr.bf16.mxu0 0
        %895 = vmatmul.mubr.bf16.gmra.mrb[0].mxu0 %v857
        %v896 = vpop.f32.mrb[0].mxu0
        %v897 = vadd.f32 0.0, %v896
        %v898 = vpop.f32.mrb[0].mxu0
        %v899 = vpop.f32.mrb[0].mxu0
        %v900 = vpop.f32.mrb[0].mxu0
        %901 = vdwg.mxu0
        %v903 = vsel %vm763, %v734, 0
        %v906 = vsel %vm763, %v748, 0
        %908 = vmatprep.subr.bf16.mxu0 0
        %909 = vmatpush1.bf16.xpose.msra.mxu0 %v906
        %910 = vmatprep.subr.bf16.mxu0 0
        %911 = vmatpush1.bf16.xpose.msra.mxu0 0
        %912 = vmatprep.subr.bf16.mxu0 0
        %913 = vmatpush1.bf16.xpose.msra.mxu0 0
        %914 = vmatprep.subr.bf16.mxu0 0
        %915 = vmatpush1.bf16.xpose.msra.mxu0 0
        %916 = vmatprep.subr.bf16.mxu0 0
        %917 = vmatpush1.bf16.xpose.msra.mxu0 0
        %918 = vmatprep.subr.bf16.mxu0 0
        %919 = vmatpush1.bf16.xpose.msra.mxu0 0
        %920 = vmatprep.subr.bf16.mxu0 0
        %921 = vmatpush1.bf16.xpose.msra.mxu0 0
        %922 = vmatprep.subr.bf16.mxu0 0
        %923 = vmatpush1.bf16.xpose.msra.mxu0 0
        %924 = vmatprep.subr.bf16.mxu0 0
        %925 = vmatpush1.bf16.xpose.msra.mxu0 0
        %926 = vmatprep.subr.bf16.mxu0 0
        %927 = vmatpush1.bf16.xpose.msra.mxu0 0
        %928 = vmatprep.subr.bf16.mxu0 0
        %929 = vmatpush1.bf16.xpose.msra.mxu0 0
        %930 = vmatprep.subr.bf16.mxu0 0
        %931 = vmatpush1.bf16.xpose.msra.mxu0 0
        %932 = vmatprep.subr.bf16.mxu0 0
        %933 = vmatpush1.bf16.xpose.msra.mxu0 0
        %934 = vmatprep.subr.bf16.mxu0 0
        %935 = vmatpush1.bf16.xpose.msra.mxu0 0
        %936 = vmatprep.subr.bf16.mxu0 0
        %937 = vmatpush1.bf16.xpose.msra.mxu0 0
        %938 = vmatprep.subr.bf16.mxu0 0
        %939 = vmatpush1.bf16.xpose.msra.mxu0 0
        %940 = vmatprep.mubr.bf16.mxu0 0
        %941 = vmatmul.mubr.bf16.gmra.mrb[0].mxu0 %v903
        %v942 = vpop.f32.mrb[0].mxu0
        %v943 = vadd.f32 0.0, %v942
        %v944 = vpop.f32.mrb[0].mxu0
        %v945 = vpop.f32.mrb[0].mxu0
        %v946 = vpop.f32.mrb[0].mxu0
        %947 = vdwg.mxu0
        %v948 = vsel %vm763, %v805, -inf
        %949 = vmax.xlane.f32.xlu0 %v948
        %v950 = vpop.xlane.xlu0 %949
        %v951 = vsel %vm763, %v851, -inf
        %952 = vmax.xlane.f32.xlu0 %v951
        %v953 = vpop.xlane.xlu0 %952
        %v954 = vsel %vm763, %v897, -inf
        %955 = vmax.xlane.f32.xlu0 %v954
        %v956 = vpop.xlane.xlu0 %955
        %v957 = vsel %vm763, %v943, -inf
        %958 = vmax.xlane.f32.xlu0 %v957
        %v959 = vpop.xlane.xlu0 %958
        %v960 = vsub.f32 %v805, %v950
        %v961 = vsub.f32 %v851, %v953
        %v962 = vsub.f32 %v897, %v956
        %v963 = vsub.f32 %v943, %v959
        %v964 = vmul.f32 %v960, 1.442695
        %v965 = vpow.pop %v964
        %v966 = vmul.f32 %v961, 1.442695
        %v967 = vpow.pop %v966
        %v968 = vmul.f32 %v962, 1.442695
        %v969 = vpow.pop %v968
        %v970 = vmul.f32 %v963, 1.442695
        %v971 = vpow.pop %v970
        %v972 = vsel %vm763, %v965, 0.0
        %973 = vadd.xlane.f32.xlu0 %v972
        %v974 = vpop.xlane.xlu0 %973
        %v975 = vsel %vm763, %v967, 0.0
        %976 = vadd.xlane.f32.xlu0 %v975
        %v977 = vpop.xlane.xlu0 %976
        %v978 = vsel %vm763, %v969, 0.0
        %979 = vadd.xlane.f32.xlu0 %v978
        %v980 = vpop.xlane.xlu0 %979
        %v981 = vsel %vm763, %v971, 0.0
        %982 = vadd.xlane.f32.xlu0 %v981
        %v983 = vpop.xlane.xlu0 %982
        %v984 = vrcp.pop %v974
        %v985 = vrcp.pop %v977
        %v986 = vrcp.pop %v980
        %v987 = vrcp.pop %v983
        %v988 = vmul.f32 %v965, %v984
        %v989 = vmul.f32 %v967, %v985
        %v990 = vmul.f32 %v969, %v986
        %v991 = vmul.f32 %v971, %v987
        %v992 = vpack.c.bf16 %v988, %v988
        %v993 = vpack.c.bf16 %v989, %v989
        %v994 = vpack.c.bf16 %v990, %v990
        %v995 = vpack.c.bf16 %v991, %v991
        %v997 = vsel %vm763, %v992, 0
        %vm999 = vcmask 1043456
        %v1001 = vsel %vm999, %v759, 0
        %1003 = vmatprep.subr.bf16.mxu0 0
        %1004 = vmatpush1.bf16.msra.mxu0 %v1001
        %1005 = vmatprep.subr.bf16.mxu0 0
        %1006 = vmatpush1.bf16.msra.mxu0 0
        %1007 = vmatprep.subr.bf16.mxu0 0
        %1008 = vmatpush1.bf16.msra.mxu0 0
        %1009 = vmatprep.subr.bf16.mxu0 0
        %1010 = vmatpush1.bf16.msra.mxu0 0
        %1011 = vmatprep.subr.bf16.mxu0 0
        %1012 = vmatpush1.bf16.msra.mxu0 0
        %1013 = vmatprep.subr.bf16.mxu0 0
        %1014 = vmatpush1.bf16.msra.mxu0 0
        %1015 = vmatprep.subr.bf16.mxu0 0
        %1016 = vmatpush1.bf16.msra.mxu0 0
        %1017 = vmatprep.subr.bf16.mxu0 0
        %1018 = vmatpush1.bf16.msra.mxu0 0
        %1019 = vmatprep.subr.bf16.mxu0 0
        %1020 = vmatpush1.bf16.msra.mxu0 0
        %1021 = vmatprep.subr.bf16.mxu0 0
        %1022 = vmatpush1.bf16.msra.mxu0 0
        %1023 = vmatprep.subr.bf16.mxu0 0
        %1024 = vmatpush1.bf16.msra.mxu0 0
        %1025 = vmatprep.subr.bf16.mxu0 0
        %1026 = vmatpush1.bf16.msra.mxu0 0
        %1027 = vmatprep.subr.bf16.mxu0 0
        %1028 = vmatpush1.bf16.msra.mxu0 0
        %1029 = vmatprep.subr.bf16.mxu0 0
        %1030 = vmatpush1.bf16.msra.mxu0 0
        %1031 = vmatprep.subr.bf16.mxu0 0
        %1032 = vmatpush1.bf16.msra.mxu0 0
        %1033 = vmatprep.subr.bf16.mxu0 0
        %1034 = vmatpush1.bf16.msra.mxu0 0
        %1035 = vmatprep.mubr.bf16.mxu0 0
        %1036 = vmatmul.mubr.bf16.gmra.mrb[0].mxu0 %v997
        %v1037 = vpop.f32.mrb[0].mxu0
        %v1038 = vadd.f32 0.0, %v1037
        %v1039 = vpop.f32.mrb[0].mxu0
        %v1040 = vpop.f32.mrb[0].mxu0
        %v1041 = vpop.f32.mrb[0].mxu0
        %1042 = vdwg.mxu0
        %v1044 = vsel %vm763, %v993, 0
        %v1047 = vsel %vm999, %v760, 0
        %1049 = vmatprep.subr.bf16.mxu0 0
        %1050 = vmatpush1.bf16.msra.mxu0 %v1047
        %1051 = vmatprep.subr.bf16.mxu0 0
        %1052 = vmatpush1.bf16.msra.mxu0 0
        %1053 = vmatprep.subr.bf16.mxu0 0
        %1054 = vmatpush1.bf16.msra.mxu0 0
        %1055 = vmatprep.subr.bf16.mxu0 0
        %1056 = vmatpush1.bf16.msra.mxu0 0
        %1057 = vmatprep.subr.bf16.mxu0 0
        %1058 = vmatpush1.bf16.msra.mxu0 0
        %1059 = vmatprep.subr.bf16.mxu0 0
        %1060 = vmatpush1.bf16.msra.mxu0 0
        %1061 = vmatprep.subr.bf16.mxu0 0
        %1062 = vmatpush1.bf16.msra.mxu0 0
        %1063 = vmatprep.subr.bf16.mxu0 0
        %1064 = vmatpush1.bf16.msra.mxu0 0
        %1065 = vmatprep.subr.bf16.mxu0 0
        %1066 = vmatpush1.bf16.msra.mxu0 0
        %1067 = vmatprep.subr.bf16.mxu0 0
        %1068 = vmatpush1.bf16.msra.mxu0 0
        %1069 = vmatprep.subr.bf16.mxu0 0
        %1070 = vmatpush1.bf16.msra.mxu0 0
        %1071 = vmatprep.subr.bf16.mxu0 0
        %1072 = vmatpush1.bf16.msra.mxu0 0
        %1073 = vmatprep.subr.bf16.mxu0 0
        %1074 = vmatpush1.bf16.msra.mxu0 0
        %1075 = vmatprep.subr.bf16.mxu0 0
        %1076 = vmatpush1.bf16.msra.mxu0 0
        %1077 = vmatprep.subr.bf16.mxu0 0
        %1078 = vmatpush1.bf16.msra.mxu0 0
        %1079 = vmatprep.subr.bf16.mxu0 0
        %1080 = vmatpush1.bf16.msra.mxu0 0
        %1081 = vmatprep.mubr.bf16.mxu0 0
        %1082 = vmatmul.mubr.bf16.gmra.mrb[0].mxu0 %v1044
        %v1083 = vpop.f32.mrb[0].mxu0
        %v1084 = vadd.f32 0.0, %v1083
        %v1085 = vpop.f32.mrb[0].mxu0
        %v1086 = vpop.f32.mrb[0].mxu0
        %v1087 = vpop.f32.mrb[0].mxu0
        %1088 = vdwg.mxu0
        %v1090 = vsel %vm763, %v994, 0
        %v1093 = vsel %vm999, %v761, 0
        %1095 = vmatprep.subr.bf16.mxu0 0
        %1096 = vmatpush1.bf16.msra.mxu0 %v1093
        %1097 = vmatprep.subr.bf16.mxu0 0
        %1098 = vmatpush1.bf16.msra.mxu0 0
        %1099 = vmatprep.subr.bf16.mxu0 0
        %1100 = vmatpush1.bf16.msra.mxu0 0
        %1101 = vmatprep.subr.bf16.mxu0 0
        %1102 = vmatpush1.bf16.msra.mxu0 0
        %1103 = vmatprep.subr.bf16.mxu0 0
        %1104 = vmatpush1.bf16.msra.mxu0 0
        %1105 = vmatprep.subr.bf16.mxu0 0
        %1106 = vmatpush1.bf16.msra.mxu0 0
        %1107 = vmatprep.subr.bf16.mxu0 0
        %1108 = vmatpush1.bf16.msra.mxu0 0
        %1109 = vmatprep.subr.bf16.mxu0 0
        %1110 = vmatpush1.bf16.msra.mxu0 0
        %1111 = vmatprep.subr.bf16.mxu0 0
        %1112 = vmatpush1.bf16.msra.mxu0 0
        %1113 = vmatprep.subr.bf16.mxu0 0
        %1114 = vmatpush1.bf16.msra.mxu0 0
        %1115 = vmatprep.subr.bf16.mxu0 0
        %1116 = vmatpush1.bf16.msra.mxu0 0
        %1117 = vmatprep.subr.bf16.mxu0 0
        %1118 = vmatpush1.bf16.msra.mxu0 0
        %1119 = vmatprep.subr.bf16.mxu0 0
        %1120 = vmatpush1.bf16.msra.mxu0 0
        %1121 = vmatprep.subr.bf16.mxu0 0
        %1122 = vmatpush1.bf16.msra.mxu0 0
        %1123 = vmatprep.subr.bf16.mxu0 0
        %1124 = vmatpush1.bf16.msra.mxu0 0
        %1125 = vmatprep.subr.bf16.mxu0 0
        %1126 = vmatpush1.bf16.msra.mxu0 0
        %1127 = vmatprep.mubr.bf16.mxu0 0
        %1128 = vmatmul.mubr.bf16.gmra.mrb[0].mxu0 %v1090
        %v1129 = vpop.f32.mrb[0].mxu0
        %v1130 = vadd.f32 0.0, %v1129
        %v1131 = vpop.f32.mrb[0].mxu0
        %v1132 = vpop.f32.mrb[0].mxu0
        %v1133 = vpop.f32.mrb[0].mxu0
        %1134 = vdwg.mxu0
        %v1136 = vsel %vm763, %v995, 0
        %v1139 = vsel %vm999, %v762, 0
        %1141 = vmatprep.subr.bf16.mxu0 0
        %1142 = vmatpush1.bf16.msra.mxu0 %v1139
        %1143 = vmatprep.subr.bf16.mxu0 0
        %1144 = vmatpush1.bf16.msra.mxu0 0
        %1145 = vmatprep.subr.bf16.mxu0 0
        %1146 = vmatpush1.bf16.msra.mxu0 0
        %1147 = vmatprep.subr.bf16.mxu0 0
        %1148 = vmatpush1.bf16.msra.mxu0 0
        %1149 = vmatprep.subr.bf16.mxu0 0
        %1150 = vmatpush1.bf16.msra.mxu0 0
        %1151 = vmatprep.subr.bf16.mxu0 0
        %1152 = vmatpush1.bf16.msra.mxu0 0
        %1153 = vmatprep.subr.bf16.mxu0 0
        %1154 = vmatpush1.bf16.msra.mxu0 0
        %1155 = vmatprep.subr.bf16.mxu0 0
        %1156 = vmatpush1.bf16.msra.mxu0 0
        %1157 = vmatprep.subr.bf16.mxu0 0
        %1158 = vmatpush1.bf16.msra.mxu0 0
        %1159 = vmatprep.subr.bf16.mxu0 0
        %1160 = vmatpush1.bf16.msra.mxu0 0
        %1161 = vmatprep.subr.bf16.mxu0 0
        %1162 = vmatpush1.bf16.msra.mxu0 0
        %1163 = vmatprep.subr.bf16.mxu0 0
        %1164 = vmatpush1.bf16.msra.mxu0 0
        %1165 = vmatprep.subr.bf16.mxu0 0
        %1166 = vmatpush1.bf16.msra.mxu0 0
        %1167 = vmatprep.subr.bf16.mxu0 0
        %1168 = vmatpush1.bf16.msra.mxu0 0
        %1169 = vmatprep.subr.bf16.mxu0 0
        %1170 = vmatpush1.bf16.msra.mxu0 0
        %1171 = vmatprep.subr.bf16.mxu0 0
        %1172 = vmatpush1.bf16.msra.mxu0 0
        %1173 = vmatprep.mubr.bf16.mxu0 0
        %1174 = vmatmul.mubr.bf16.gmra.mrb[0].mxu0 %v1136
        %v1175 = vpop.f32.mrb[0].mxu0
        %v1176 = vadd.f32 0.0, %v1175
        %v1177 = vpop.f32.mrb[0].mxu0
        %v1178 = vpop.f32.mrb[0].mxu0
        %v1179 = vpop.f32.mrb[0].mxu0
        %1180 = vdwg.mxu0
        %1182 = vrot.lane.b32.xlu0 %v1084, 8
        %v1183 = vpop.permute.xlu0 %1182
        %1186 = vrot.lane.b32.xlu0 %v1130, 16
        %v1187 = vpop.permute.xlu0 %1186
        %1190 = vrot.lane.b32.xlu0 %v1176, 24
        %v1191 = vpop.permute.xlu0 %1190
        %v1193 = vsel %vm763, %v1038, %v1183
        %vm1194 = vcmask 130048
        %v1195 = vsel %vm1194, %v1193, %v1187
        %vm1196 = vcmask 195584
        %v1197 = vsel %vm1196, %v1195, %v1191
        %v1198 = vpack.c.bf16 %v1197, %v1197
        %v1199 = vld [vmem:[%s9] sm:$0xf]
        %v1200 = vld [vmem:[%s9 + $0x4] sm:$0xf]
        %v1201 = vld [vmem:[%s9 + $0x8] sm:$0xf]
        %v1202 = vld [vmem:[%s9 + $0xc] sm:$0xf]
        %v1203 = vld [vmem:[%s10] sm:$0x1]
        %v1205 = vlaneseq
        %v1206 = vshrl.u32 %v1205, 7
        %v1207 = vsub.s32 0, %v1206
        %v1208 = vrot.slane %v1203, %v1207
        %v1214 = vunpack.c.l.b16 %v1199
        %v1215 = vunpack.c.l.b16 %v1200
        %v1216 = vunpack.c.l.b16 %v1201
        %v1217 = vunpack.c.l.b16 %v1202
        %v1218 = vpack.c.b16 %v1215, %v1214
        %v1219 = vpack.c.b16 %v1217, %v1216
        %v1223 = vsel %vm545, %v1198, 0
        %1225 = vmatprep.subr.bf16.mxu0 0
        %1226 = vmatpush1.bf16.msra.mxu0 %v1218
        %1227 = vmatprep.subr.bf16.mxu0 0
        %1228 = vmatpush1.bf16.msra.mxu0 %v1219
        %1229 = vmatprep.subr.bf16.mxu0 0
        %1230 = vmatpush1.bf16.msra.mxu0 0
        %1231 = vmatprep.subr.bf16.mxu0 0
        %1232 = vmatpush1.bf16.msra.mxu0 0
        %1233 = vmatprep.subr.bf16.mxu0 0
        %1234 = vmatpush1.bf16.msra.mxu0 0
        %1235 = vmatprep.subr.bf16.mxu0 0
        %1236 = vmatpush1.bf16.msra.mxu0 0
        %1237 = vmatprep.subr.bf16.mxu0 0
        %1238 = vmatpush1.bf16.msra.mxu0 0
        %1239 = vmatprep.subr.bf16.mxu0 0
        %1240 = vmatpush1.bf16.msra.mxu0 0
        %1241 = vmatprep.subr.bf16.mxu0 0
        %1242 = vmatpush1.bf16.msra.mxu0 0
        %1243 = vmatprep.subr.bf16.mxu0 0
        %1244 = vmatpush1.bf16.msra.mxu0 0
        %1245 = vmatprep.subr.bf16.mxu0 0
        %1246 = vmatpush1.bf16.msra.mxu0 0
        %1247 = vmatprep.subr.bf16.mxu0 0
        %1248 = vmatpush1.bf16.msra.mxu0 0
        %1249 = vmatprep.subr.bf16.mxu0 0
        %1250 = vmatpush1.bf16.msra.mxu0 0
        %1251 = vmatprep.subr.bf16.mxu0 0
        %1252 = vmatpush1.bf16.msra.mxu0 0
        %1253 = vmatprep.subr.bf16.mxu0 0
        %1254 = vmatpush1.bf16.msra.mxu0 0
        %1255 = vmatprep.subr.bf16.mxu0 0
        %1256 = vmatpush1.bf16.msra.mxu0 0
        %1257 = vmatprep.mubr.bf16.mxu0 0
        %1258 = vmatmul.mubr.bf16.gmra.mrb[0].mxu0 %v1223
        %v1259 = vpop.f32.mrb[0].mxu0
        %v1260 = vadd.f32 %v1208, %v1259
        %v1261 = vpop.f32.mrb[0].mxu0
        %v1262 = vpop.f32.mrb[0].mxu0
        %v1263 = vpop.f32.mrb[0].mxu0
        %1264 = vdwg.mxu0
        %1265 = vst.msk [vmem:[%s514] sm:$0xff] %vm545, %v1260
        %s1266 = sand.u32 %s287, 1
        %s1267 = scalar_lea.sflag [#allocation4], %s1266
        %s1268 = sand.u32 %s287, 1
        %s1269 = smul.addr %s1268, 8
        %s1270 = scalar_lea.vmem [#allocation13], %s1269
        // Predicated region
        $region89: #{tpu_custom_call.1} parent=63 // pred_check
          %p1271 = pneg %p297
        $region90: #{tpu_custom_call.1} parent=63 // pred_check_branch
          %1273 = sbr.rel (%p1271) target = $region92
        $region91: #{tpu_custom_call.1} parent=63 // pred_region
          %s1275 = ssub.s32 128, 128
          %1276 = vsyncadd %s1267, %s1275
          %s1277 = smul.addr %s33, 128
          %s1278 = scalar_lea.hbm %s11, %s1277
          %s1280 = sshll.u32 %s1270, 4
          %s1281 = int_to_ptr.vmem [resolvable:$true] %s1280
          %1283 = dma.vmem_to_hbm [thread:$0]  %s1281, 128, %s1278, %s1267
        $region92: #{tpu_custom_call.1} parent=63 // pred_fallthru
          _
      $region64: #{tpu_custom_call.1} parent=5 // pred_fallthru
        _
      %p1284 = scmp.le.s32.totalorder 2, %s28
      // Predicated region
      $region93: #{tpu_custom_call.1} parent=5 // pred_check
        %p1285 = pneg %p1284
      $region94: #{tpu_custom_call.1} parent=5 // pred_check_branch
        %1287 = sbr.rel (%p1285) target = $region96
      $region95: #{tpu_custom_call.1} parent=5 // pred_region
        %s1288 = ssub.s32 %s28, 2
        // Predicated region
        $region97: #{tpu_custom_call.1} parent=95 // pred_check
          %p1289 = pneg %p303
        $region98: #{tpu_custom_call.1} parent=95 // pred_check_branch
          %1291 = sbr.rel (%p1289) target = $region100
        $region99: #{tpu_custom_call.1} parent=95 // pred_region
          %s1292 = sand.u32 %s288, 1
          %s1293 = scalar_lea.sflag [#allocation4], %s1292
          %s1294 = sand.u32 %s288, 1
          %s1295 = smul.addr %s1294, 8
          %s1296 = scalar_lea.vmem [#allocation13], %s1295
          %1297 = dma.done %s1293, 128
        $region100: #{tpu_custom_call.1} parent=95 // pred_fallthru
          _
      $region96: #{tpu_custom_call.1} parent=5 // pred_fallthru
        _
    $region6: #{tpu_custom_call.1} parent=1 // loop_footer
      %s32 = sadd.s32 1, %s28
    $region7: #{tpu_custom_call.1} parent=1 // loop_footer_branch
      %27 = sbr.rel target = $region3
    $region8: #{tpu_custom_call.1} parent=1 // loop_exit
      _
    %1298 = vsyncpa [#allocation3], 1
    %s1299 = scalar_lea.sflag [#allocation3], 1
    %1300 = vsyncpa %s1299, 1
    %1301 = vsyncpa [#allocation6], 1
    %s1302 = scalar_lea.sflag [#allocation6], 1
    %1303 = vsyncpa %s1302, 1
    %1304 = vsyncpa [#allocation9], 1
    %1305 = vsyncpa [#allocation12], 1
    %1306 = vsyncpa [#allocation4], 1
    %s1307 = scalar_lea.sflag [#allocation4], 1
    %1308 = vsyncpa %s1307, 1

</llo_original>
